<compile_context>
chip_gen: v6e
topology: v6e:2x2x1
jax: 0.10.0
libtpu: 0.0.40
codegen_flags: <defaults>
</compile_context>

<pallas_src>
import functools

import jax
import jax.numpy as jnp
import numpy as np
from jax import lax
from jax.experimental import pallas as pl
from jax.experimental.pallas import tpu as pltpu

ACTOR_FEAT = 2          # `actor_feat` in the PyTorch module
LN_EPS = 1e-5           # nn.LayerNorm default eps


def _layernorm(x, gamma, beta):
    mean = jnp.mean(x, axis=-1, keepdims=True)
    var = jnp.mean((x - mean) ** 2, axis=-1, keepdims=True)
    return (x - mean) * lax.rsqrt(var + LN_EPS) * gamma + beta


def _round_up(x, m):
    return ((x + m - 1) // m) * m


def actor_critic_kernel(*refs, seq_len, embed, critic, scale, act_dim,
                        mx_dtype, gate_dtype, t_chunk, use_mxu_small):
    if critic:
        (act_obs_ref, env_obs_ref, a_ref,
         w_ih_ref, w_hh_ref, b_lstm_ref,
         w1_act_ref, w1_h_ref, w1_a_ref, b1_ref, g1_ref, be1_ref,
         w2_ref, b2_ref, g2_ref, be2_ref,
         w3_ref, b3_ref, out_ref) = refs
    else:
        (act_obs_ref, env_obs_ref,
         w_ih_ref, w_hh_ref, b_lstm_ref,
         w1_act_ref, w1_h_ref, b1_ref, g1_ref, be1_ref,
         w2_ref, b2_ref, g2_ref, be2_ref,
         w3_ref, b3_ref, out_ref) = refs
        a_ref = None
        w1_a_ref = None

    _, batch, d_env = env_obs_ref.shape                  # env is time-major, mx_dtype
    act_obs = act_obs_ref[...].astype(jnp.float32)       # (B, ACTOR_FEAT)

    w_ih = w_ih_ref[...]                                 # (D_env, 4*embed), mx_dtype
    w_hh = w_hh_ref[...]                                 # (embed, 4*embed), mx_dtype
    b_lstm = b_lstm_ref[...].astype(jnp.float32)         # (1, 4*embed) (= b_ih + b_hh)

    def lstm_step(gates_in, h, c):
        # Only h @ w_hh plus elementwise gate math sits in the per-step serial chain.
        gates = gates_in + jnp.dot(h, w_hh, preferred_element_type=jnp.float32)
        # NOTE: gate slices are 128-lane aligned only if embed % 128 == 0 (pick
        # embed=128 on v5e, 256 on v6e/v7x for MXU-shaped tiles and free slicing).
        g = gates.astype(gate_dtype)
        i_g = jax.nn.sigmoid(g[:, 0 * embed:1 * embed])
        f_g = jax.nn.sigmoid(g[:, 1 * embed:2 * embed])
        g_g = jnp.tanh(g[:, 2 * embed:3 * embed])
        o_g = jax.nn.sigmoid(g[:, 3 * embed:4 * embed])
        # c and the gate pre-activation accumulation stay f32 for recurrence accuracy.
        c = (f_g.astype(jnp.float32) * c
             + i_g.astype(jnp.float32) * g_g.astype(jnp.float32))
        h = (o_g * jnp.tanh(c.astype(gate_dtype))).astype(mx_dtype)
        return h, c

    def run_chunk(env_chunk, h, c):
        # env_chunk: (tc, batch, d_env) in mx_dtype.  One batched input projection
        # per chunk (good MXU M-fill) bounded to tc*batch rows of f32 liveness.
        tc = env_chunk.shape[0]
        g_flat = jnp.dot(env_chunk.reshape(tc * batch, d_env), w_ih,
                         preferred_element_type=jnp.float32) + b_lstm
        g3 = g_flat.reshape(tc, batch, 4 * embed)
        for t in range(tc):                               # leading-axis index: free
            h, c = lstm_step(g3[t], h, c)
        return h, c

    h = jnp.zeros((batch, embed), mx_dtype)
    c = jnp.zeros((batch, embed), jnp.float32)

    n_full = seq_len // t_chunk
    rem = seq_len - n_full * t_chunk

    if n_full > 0:
        if n_full <= 4:
            # Short sequences: static unroll (LLO gets full scheduling visibility).
            for ci in range(n_full):
                chunk = env_obs_ref[pl.ds(ci * t_chunk, t_chunk)]
                h, c = run_chunk(chunk, h, c)
        else:
            # Long sequences: rolled loop over chunks bounds vreg live ranges.
            def chunk_body(ci, carry):
                hh, cc = carry
                start = pl.multiple_of(ci * t_chunk, t_chunk)
                chunk = env_obs_ref[pl.ds(start, t_chunk)]
                return run_chunk(chunk, hh, cc)
            h, c = lax.fori_loop(0, n_full, chunk_body, (h, c))
    if rem:
        h, c = run_chunk(env_obs_ref[pl.ds(n_full * t_chunk, rem)], h, c)

    # ---- fc1 + LayerNorm + ReLU.  embed-wide term on the MXU; tiny-K terms either as
    # VPU rank-1 updates (small netsize) or one concatenated tiny-K MXU pass.
    z1 = (jnp.dot(h, w1_h_ref[...], preferred_element_type=jnp.float32)
          + b1_ref[...].astype(jnp.float32))
    if use_mxu_small:
        if critic:
            small_in = jnp.concatenate(
                [act_obs, a_ref[...].astype(jnp.float32)], axis=1).astype(mx_dtype)
            small_w = jnp.concatenate(
                [w1_act_ref[...].astype(mx_dtype), w1_a_ref[...].astype(mx_dtype)], 0)
        else:
            small_in = act_obs.astype(mx_dtype)
            small_w = w1_act_ref[...].astype(mx_dtype)
        z1 = z1 + jnp.dot(small_in, small_w, preferred_element_type=jnp.float32)
    else:
        w1_act = w1_act_ref[...].astype(jnp.float32)
        for k in range(ACTOR_FEAT):
            z1 = z1 + act_obs[:, k:k + 1] * w1_act[k:k + 1, :]
        if critic:
            a = a_ref[...].astype(jnp.float32)
            if act_dim <= 8:
                w1_a = w1_a_ref[...].astype(jnp.float32)
                for k in range(act_dim):
                    z1 = z1 + a[:, k:k + 1] * w1_a[k:k + 1, :]
            else:
                z1 = z1 + jnp.dot(a.astype(mx_dtype), w1_a_ref[...].astype(mx_dtype),
                                  preferred_element_type=jnp.float32)
    x1 = jnp.maximum(_layernorm(z1, g1_ref[...], be1_ref[...]), 0.0)

    z2 = (jnp.dot(x1.astype(mx_dtype), w2_ref[...],
                  preferred_element_type=jnp.float32)
          + b2_ref[...].astype(jnp.float32))
    x2 = jnp.maximum(_layernorm(z2, g2_ref[...], be2_ref[...]), 0.0)

    z3 = (jnp.dot(x2.astype(mx_dtype), w3_ref[...],
                  preferred_element_type=jnp.float32)
          + b3_ref[...].astype(jnp.float32))
    if critic:
        out_ref[...] = z3
    else:
        out_ref[...] = jnp.tanh(z3) * scale


def init_params(key, *, d_env, embed, netsize, act_dim, critic):
    """Deterministic PyTorch-style uniform init; weights stored as (in, out)."""
    ks = list(jax.random.split(key, 16))

    def unif(k, shape, bound):
        return jax.random.uniform(k, shape, jnp.float32, -bound, bound)

    lstm_b = 1.0 / np.sqrt(embed)
    fc1_in = ACTOR_FEAT + embed + (act_dim if critic else 0)
    fc1_b = 1.0 / np.sqrt(fc1_in)
    fc2_b = 1.0 / np.sqrt(netsize)
    out_dim = 1 if critic else act_dim

    return {
        "w_ih": unif(ks[0], (d_env, 4 * embed), lstm_b),
        "w_hh": unif(ks[1], (embed, 4 * embed), lstm_b),
        "b_lstm": (unif(ks[2], (1, 4 * embed), lstm_b)
                   + unif(ks[3], (1, 4 * embed), lstm_b)),   # b_ih + b_hh
        "w1_act": unif(ks[4], (ACTOR_FEAT, netsize), fc1_b),
        "w1_h": unif(ks[5], (embed, netsize), fc1_b),
        "w1_a": (unif(ks[6], (act_dim, netsize), fc1_b) if critic
                 else jnp.zeros((act_dim, netsize), jnp.float32)),
        "b1": unif(ks[7], (1, netsize), fc1_b),
        "g1": jnp.ones((1, netsize), jnp.float32),
        "be1": jnp.zeros((1, netsize), jnp.float32),
        "w2": unif(ks[8], (netsize, netsize), fc2_b),
        "b2": unif(ks[9], (1, netsize), fc2_b),
        "g2": jnp.ones((1, netsize), jnp.float32),
        "be2": jnp.zeros((1, netsize), jnp.float32),
        "w3": unif(ks[10], (netsize, out_dim), fc2_b),
        "b3": unif(ks[11], (1, out_dim), fc2_b),
    }


def _device_kind():
    try:
        return jax.devices()[0].device_kind.lower()
    except Exception:
        return ""


def _vmem_capacity_bytes(kind):
    try:
        return int(pltpu.get_tpu_info().vmem_capacity_bytes)
    except Exception:
        return (64 << 20) if "7" in kind else (128 << 20)


def actor_critic_forward(params, x, a=None, *, critic, scale, embed, act_dim,
                         batch_block=256):
    """Wrapper: slices obs, pads/tiles the batch, calls the Pallas kernel."""
    B, T, F = x.shape
    d_env = F - ACTOR_FEAT
    netsize = params["w2"].shape[0]
    out_dim = 1 if critic else act_dim

    kind = _device_kind()
    is_v5 = "v5" in kind
    two_tc = "7" in kind                      # v7x: 2 TensorCores per chip
    vmem_cap = _vmem_capacity_bytes(kind)

    # bf16 MXU operands from 128 up on bf16-native chips (256 on v5e); elementwise /
    # LayerNorm / c-recurrence always stays f32.
    bf16_threshold = 256 if is_v5 else 128
    mx_dtype = (jnp.bfloat16 if max(netsize, embed) >= bf16_threshold
                else jnp.float32)
    gate_dtype = (jnp.bfloat16 if (mx_dtype == jnp.bfloat16 and not is_v5)
                  else jnp.float32)           # v5e has no bf16 VPU/EUP
    use_mxu_small = netsize >= 512

    mx_names = {"w_ih", "w_hh", "w1_h", "w2", "w3"}
    if use_mxu_small:
        mx_names.add("w1_act")
    if critic and (act_dim > 8 or use_mxu_small):
        mx_names.add("w1_a")

    # Generation-aware batch block: shrink on 64-MiB-VMEM chips for big models.
    if vmem_cap <= (64 << 20) and max(netsize, embed) >= 512:
        batch_block = min(batch_block, 128)

    if B <= batch_block:
        n_blocks = 1
        TB = _round_up(max(B, 1), 8)
    else:
        n_blocks = pl.cdiv(B, batch_block)
        if two_tc and n_blocks % 2:           # balance work across both TensorCores
            n_blocks += 1
        TB = _round_up(pl.cdiv(B, n_blocks), 8)
    Bp = n_blocks * TB
    pad = Bp - B
    t_chunk = min(T, 8)

    xf = x.astype(jnp.float32)
    # Padded rows are zero; LayerNorm stays finite only because of LN_EPS, and the
    # rows are dropped by the final [:B] slice.
    act_obs = jnp.pad(xf[:, 0, :ACTOR_FEAT], ((0, pad), (0, 0)))
    # Time-major (T, Bp, d_env) and already in mx_dtype: halves the largest DMA when
    # bf16 and removes the in-kernel full-tensor cast copy.
    env_obs = jnp.pad(jnp.transpose(xf[:, :, ACTOR_FEAT:], (1, 0, 2)),
                      ((0, 0), (0, pad), (0, 0))).astype(mx_dtype)

    data_inputs = [act_obs, env_obs]
    data_specs = [
        pl.BlockSpec((TB, ACTOR_FEAT), lambda i: (i, 0)),
        pl.BlockSpec((T, TB, d_env), lambda i: (0, i, 0)),
    ]
    if critic:
        if a is None:
            raise ValueError("critic head requires an action input")
        a_p = jnp.pad(a.astype(jnp.float32), ((0, pad), (0, 0)))
        data_inputs.append(a_p)
        data_specs.append(pl.BlockSpec((TB, act_dim), lambda i: (i, 0)))

    weight_names = (["w_ih", "w_hh", "b_lstm", "w1_act", "w1_h"]
                    + (["w1_a"] if critic else [])
                    + ["b1", "g1", "be1", "w2", "b2", "g2", "be2", "w3", "b3"])
    weight_arrays = [params[n].astype(mx_dtype) if n in mx_names else params[n]
                     for n in weight_names]
    inputs = data_inputs + weight_arrays

    # VMEM budget: single-buffered weights + double-buffered streamed tiles +
    # the gate-projection chunk + activation/LN temporaries + headroom.
    mx_isz = jnp.dtype(mx_dtype).itemsize
    stream_bytes = (T * TB * d_env * mx_isz + TB * ACTOR_FEAT * 4
                    + (TB * act_dim * 4 if critic else 0) + TB * out_dim * 4)
    est = (sum(w.size * w.dtype.itemsize for w in weight_arrays)
           + 2 * stream_bytes
           + t_chunk * TB * 4 * embed * 4
           + 8 * TB * max(embed, netsize) * 4
           + (4 << 20))
    vmem_limit = int(min(int(vmem_cap * 0.9), max(est, 32 << 20)))

    kernel = functools.partial(actor_critic_kernel, seq_len=T, embed=embed,
                               critic=critic, scale=scale, act_dim=act_dim,
                               mx_dtype=mx_dtype, gate_dtype=gate_dtype,
                               t_chunk=t_chunk, use_mxu_small=use_mxu_small)
    out_shape = jax.ShapeDtypeStruct((Bp, out_dim), jnp.float32)

    if n_blocks == 1:
        # Tiny batch: gridless, whole arrays resident in VMEM.
        out = pl.pallas_call(
            kernel,
            out_shape=out_shape,
            in_specs=[pl.BlockSpec(memory_space=pltpu.MemorySpace.VMEM)] * len(inputs),
            out_specs=pl.BlockSpec(memory_space=pltpu.MemorySpace.VMEM),
            compiler_params=pltpu.CompilerParams(vmem_limit_bytes=vmem_limit),
        )(*inputs)
    else:
        # Large batch: shard TB-row blocks across a parallel grid axis (fills both
        # TensorCores on v7x); weights are grid-invariant and single-buffered.
        def call(single_buffer_weights):
            w_specs = []
            for arr in weight_arrays:
                kw = ({"pipeline_mode": pl.Buffered(1)}
                      if single_buffer_weights else {})
                w_specs.append(pl.BlockSpec(
                    arr.shape, lambda i, nd=arr.ndim: (0,) * nd, **kw))
            return pl.pallas_call(
                kernel,
                out_shape=out_shape,
                grid=(n_blocks,),
                in_specs=data_specs + w_specs,
                out_specs=pl.BlockSpec((TB, out_dim), lambda i: (i, 0)),
                compiler_params=pltpu.CompilerParams(
                    dimension_semantics=("parallel",),
                    vmem_limit_bytes=vmem_limit),
            )(*inputs)

        try:
            out = call(True)
        except Exception:
            # TODO(synk): drop this fallback once pl.Buffered(1) single-buffering is
            # available on every deployed jax version.
            out = call(False)
    return out[:B]


def reference_forward(params, x, a, *, critic, scale, embed):
    """Pure-JAX reference mirroring the PyTorch forward (for validation)."""
    act_obs = x[:, 0, :ACTOR_FEAT].astype(jnp.float32)
    env = x[:, :, ACTOR_FEAT:].astype(jnp.float32)
    B, T, _ = env.shape
    h = jnp.zeros((B, embed), jnp.float32)
    c = jnp.zeros((B, embed), jnp.float32)
    for t in range(T):
        gates = env[:, t] @ params["w_ih"] + h @ params["w_hh"] + params["b_lstm"]
        i_g = jax.nn.sigmoid(gates[:, 0 * embed:1 * embed])
        f_g = jax.nn.sigmoid(gates[:, 1 * embed:2 * embed])
        g_g = jnp.tanh(gates[:, 2 * embed:3 * embed])
        o_g = jax.nn.sigmoid(gates[:, 3 * embed:4 * embed])
        c = f_g * c + i_g * g_g
        h = o_g * jnp.tanh(c)
    parts = [act_obs, h] + ([a.astype(jnp.float32)] if critic else [])
    w1 = jnp.concatenate(
        [params["w1_act"], params["w1_h"]] + ([params["w1_a"]] if critic else []), 0)
    x1 = jnp.maximum(
        _layernorm(jnp.concatenate(parts, 1) @ w1 + params["b1"],
                   params["g1"], params["be1"]), 0.0)
    x2 = jnp.maximum(
        _layernorm(x1 @ params["w2"] + params["b2"], params["g2"], params["be2"]), 0.0)
    z3 = x2 @ params["w3"] + params["b3"]
    return z3 if critic else jnp.tanh(z3) * scale


if __name__ == "__main__":
    # Small config consistent with the module:
    #   obs_space.shape = (T=8, F=10)  -> env feature dim = 10 - actor_feat = 8
    #   act_space.shape = (2,), args.encoder = 'lstm', args.embed = 32, args.netsize = 32
    B, T, F = 2, 8, 10
    d_env, embed, netsize, act_dim = F - ACTOR_FEAT, 32, 32, 2
    scale = 1.0

    key = jax.random.PRNGKey(0)
    kx, ka, kp_actor, kp_critic, kx2, ka2, kx3 = jax.random.split(key, 7)
    x = jax.random.normal(kx, (B, T, F), jnp.float32)
    a = jax.random.normal(ka, (B, act_dim), jnp.float32)

    # Actor head (gridless path).
    p_actor = init_params(kp_actor, d_env=d_env, embed=embed, netsize=netsize,
                          act_dim=act_dim, critic=False)
    out_actor = actor_critic_forward(p_actor, x, None, critic=False, scale=scale,
                                     embed=embed, act_dim=act_dim)
    jax.block_until_ready(out_actor)
    ref_actor = reference_forward(p_actor, x, None, critic=False, scale=scale,
                                  embed=embed)
    assert out_actor.shape == (B, act_dim)
    assert np.allclose(np.asarray(out_actor), np.asarray(ref_actor),
                       atol=2e-4, rtol=2e-4)

    # Critic head (gridless path).
    p_critic = init_params(kp_critic, d_env=d_env, embed=embed, netsize=netsize,
                           act_dim=act_dim, critic=True)
    out_critic = actor_critic_forward(p_critic, x, a, critic=True, scale=scale,
                                      embed=embed, act_dim=act_dim)
    jax.block_until_ready(out_critic)
    ref_critic = reference_forward(p_critic, x, a, critic=True, scale=scale,
                                   embed=embed)
    assert out_critic.shape == (B, 1)
    assert np.allclose(np.asarray(out_critic), np.asarray(ref_critic),
                       atol=2e-4, rtol=2e-4)

    # Critic head on the gridded (batch-blocked, parallel-axis) path.
    Bg = 20
    xg = jax.random.normal(kx2, (Bg, T, F), jnp.float32)
    ag = jax.random.normal(ka2, (Bg, act_dim), jnp.float32)
    out_g = actor_critic_forward(p_critic, xg, ag, critic=True, scale=scale,
                                 embed=embed, act_dim=act_dim, batch_block=8)
    jax.block_until_ready(out_g)
    ref_g = reference_forward(p_critic, xg, ag, critic=True, scale=scale, embed=embed)
    assert out_g.shape == (Bg, 1)
    assert np.allclose(np.asarray(out_g), np.asarray(ref_g), atol=2e-4, rtol=2e-4)

    # Actor head with a long sequence (exercises the fori_loop chunked LSTM path).
    Tl = 40
    xl = jax.random.normal(kx3, (B, Tl, F), jnp.float32)
    out_l = actor_critic_forward(p_actor, xl, None, critic=False, scale=scale,
                                 embed=embed, act_dim=act_dim)
    jax.block_until_ready(out_l)
    ref_l = reference_forward(p_actor, xl, None, critic=False, scale=scale,
                              embed=embed)
    assert out_l.shape == (B, act_dim)
    assert np.allclose(np.asarray(out_l), np.asarray(ref_l), atol=2e-4, rtol=2e-4)

    print("KERNEL_OK")
</pallas_src>

<mosaic_0001>
module attributes {stable_mosaic.version = 11 : i64} {
  func.func @actor_critic_kernel(%arg0: memref<8x2xf32, #tpu.memory_space<vmem>>, %arg1: memref<8x8x8xf32, #tpu.memory_space<vmem>>, %arg2: memref<8x128xf32, #tpu.memory_space<vmem>>, %arg3: memref<32x128xf32, #tpu.memory_space<vmem>>, %arg4: memref<1x128xf32, #tpu.memory_space<vmem>>, %arg5: memref<2x32xf32, #tpu.memory_space<vmem>>, %arg6: memref<32x32xf32, #tpu.memory_space<vmem>>, %arg7: memref<1x32xf32, #tpu.memory_space<vmem>>, %arg8: memref<1x32xf32, #tpu.memory_space<vmem>>, %arg9: memref<1x32xf32, #tpu.memory_space<vmem>>, %arg10: memref<32x32xf32, #tpu.memory_space<vmem>>, %arg11: memref<1x32xf32, #tpu.memory_space<vmem>>, %arg12: memref<1x32xf32, #tpu.memory_space<vmem>>, %arg13: memref<1x32xf32, #tpu.memory_space<vmem>>, %arg14: memref<32x2xf32, #tpu.memory_space<vmem>>, %arg15: memref<1x2xf32, #tpu.memory_space<vmem>>, %arg16: memref<8x2xf32, #tpu.memory_space<vmem>>) attributes {dimension_semantics = [], scalar_prefetch = 0 : i64, scratch_operands = 0 : i64, tpu.core_type = #tpu.core_type<tc>} {
    %c0 = arith.constant 0 : index
    %c0_0 = arith.constant 0 : index
    %0 = vector.load %arg0[%c0, %c0_0] : memref<8x2xf32, #tpu.memory_space<vmem>>, vector<8x2xf32>
    %c0_1 = arith.constant 0 : index
    %c0_2 = arith.constant 0 : index
    %1 = vector.load %arg2[%c0_1, %c0_2] : memref<8x128xf32, #tpu.memory_space<vmem>>, vector<8x128xf32>
    %c0_3 = arith.constant 0 : index
    %c0_4 = arith.constant 0 : index
    %2 = vector.load %arg3[%c0_3, %c0_4] : memref<32x128xf32, #tpu.memory_space<vmem>>, vector<32x128xf32>
    %c0_5 = arith.constant 0 : index
    %c0_6 = arith.constant 0 : index
    %3 = vector.load %arg4[%c0_5, %c0_6] : memref<1x128xf32, #tpu.memory_space<vmem>>, vector<1x128xf32>
    %cst = arith.constant 0.000000e+00 : f32
    %4 = vector.broadcast %cst : f32 to vector<8x32xf32>
    %cst_7 = arith.constant 0.000000e+00 : f32
    %5 = vector.broadcast %cst_7 : f32 to vector<8x32xf32>
    %c0_8 = arith.constant 0 : index
    %c0_9 = arith.constant 0 : index
    %c0_10 = arith.constant 0 : index
    %6 = vector.load %arg1[%c0_8, %c0_9, %c0_10] : memref<8x8x8xf32, #tpu.memory_space<vmem>>, vector<8x8x8xf32>
    %7 = vector.shape_cast %6 : vector<8x8x8xf32> to vector<64x8xf32>
    %cst_11 = arith.constant dense<0.000000e+00> : vector<64x128xf32>
    %8 = tpu.matmul %7, %1, %cst_11 {dimension_numbers = #tpu.dot_dimension_numbers<[1], [0], [0], [1], [0, 0, 1, 1], [], []>} : vector<64x8xf32>, vector<8x128xf32>, vector<64x128xf32> -> vector<64x128xf32>
    %9 = vector.broadcast %3 : vector<1x128xf32> to vector<64x128xf32>
    %10 = arith.addf %8, %9 : vector<64x128xf32>
    %11 = vector.shape_cast %10 : vector<64x128xf32> to vector<8x8x128xf32>
    %12 = vector.extract_strided_slice %11 {offsets = [0, 0, 0], sizes = [1, 8, 128], strides = [1, 1, 1]} : vector<8x8x128xf32> to vector<1x8x128xf32>
    %13 = vector.shape_cast %12 : vector<1x8x128xf32> to vector<8x128xf32>
    %cst_12 = arith.constant dense<0.000000e+00> : vector<8x128xf32>
    %14 = tpu.matmul %4, %2, %cst_12 {dimension_numbers = #tpu.dot_dimension_numbers<[1], [0], [0], [1], [0, 0, 1, 1], [], []>} : vector<8x32xf32>, vector<32x128xf32>, vector<8x128xf32> -> vector<8x128xf32>
    %15 = arith.addf %13, %14 : vector<8x128xf32>
    %16 = vector.extract_strided_slice %15 {offsets = [0, 0], sizes = [8, 32], strides = [1, 1]} : vector<8x128xf32> to vector<8x32xf32>
    %17 = arith.negf %16 : vector<8x32xf32>
    %18 = math.exp %17 : vector<8x32xf32>
    %cst_13 = arith.constant 1.000000e+00 : f32
    %19 = vector.broadcast %cst_13 : f32 to vector<8x32xf32>
    %20 = arith.addf %19, %18 : vector<8x32xf32>
    %21 = arith.divf %19, %20 : vector<8x32xf32>
    %22 = vector.extract_strided_slice %15 {offsets = [0, 32], sizes = [8, 32], strides = [1, 1]} : vector<8x128xf32> to vector<8x32xf32>
    %23 = arith.negf %22 : vector<8x32xf32>
    %24 = math.exp %23 : vector<8x32xf32>
    %cst_14 = arith.constant 1.000000e+00 : f32
    %25 = vector.broadcast %cst_14 : f32 to vector<8x32xf32>
    %26 = arith.addf %25, %24 : vector<8x32xf32>
    %27 = arith.divf %25, %26 : vector<8x32xf32>
    %28 = vector.extract_strided_slice %15 {offsets = [0, 64], sizes = [8, 32], strides = [1, 1]} : vector<8x128xf32> to vector<8x32xf32>
    %29 = math.tanh %28 : vector<8x32xf32>
    %30 = vector.extract_strided_slice %15 {offsets = [0, 96], sizes = [8, 32], strides = [1, 1]} : vector<8x128xf32> to vector<8x32xf32>
    %31 = arith.negf %30 : vector<8x32xf32>
    %32 = math.exp %31 : vector<8x32xf32>
    %cst_15 = arith.constant 1.000000e+00 : f32
    %33 = vector.broadcast %cst_15 : f32 to vector<8x32xf32>
    %34 = arith.addf %33, %32 : vector<8x32xf32>
    %35 = arith.divf %33, %34 : vector<8x32xf32>
    %36 = arith.mulf %27, %5 : vector<8x32xf32>
    %37 = arith.mulf %21, %29 : vector<8x32xf32>
    %38 = arith.addf %36, %37 : vector<8x32xf32>
    %39 = math.tanh %38 : vector<8x32xf32>
    %40 = arith.mulf %35, %39 : vector<8x32xf32>
    %41 = vector.extract_strided_slice %11 {offsets = [1, 0, 0], sizes = [1, 8, 128], strides = [1, 1, 1]} : vector<8x8x128xf32> to vector<1x8x128xf32>
    %42 = vector.shape_cast %41 : vector<1x8x128xf32> to vector<8x128xf32>
    %cst_16 = arith.constant dense<0.000000e+00> : vector<8x128xf32>
    %43 = tpu.matmul %40, %2, %cst_16 {dimension_numbers = #tpu.dot_dimension_numbers<[1], [0], [0], [1], [0, 0, 1, 1], [], []>} : vector<8x32xf32>, vector<32x128xf32>, vector<8x128xf32> -> vector<8x128xf32>
    %44 = arith.addf %42, %43 : vector<8x128xf32>
    %45 = vector.extract_strided_slice %44 {offsets = [0, 0], sizes = [8, 32], strides = [1, 1]} : vector<8x128xf32> to vector<8x32xf32>
    %46 = arith.negf %45 : vector<8x32xf32>
    %47 = math.exp %46 : vector<8x32xf32>
    %cst_17 = arith.constant 1.000000e+00 : f32
    %48 = vector.broadcast %cst_17 : f32 to vector<8x32xf32>
    %49 = arith.addf %48, %47 : vector<8x32xf32>
    %50 = arith.divf %48, %49 : vector<8x32xf32>
    %51 = vector.extract_strided_slice %44 {offsets = [0, 32], sizes = [8, 32], strides = [1, 1]} : vector<8x128xf32> to vector<8x32xf32>
    %52 = arith.negf %51 : vector<8x32xf32>
    %53 = math.exp %52 : vector<8x32xf32>
    %cst_18 = arith.constant 1.000000e+00 : f32
    %54 = vector.broadcast %cst_18 : f32 to vector<8x32xf32>
    %55 = arith.addf %54, %53 : vector<8x32xf32>
    %56 = arith.divf %54, %55 : vector<8x32xf32>
    %57 = vector.extract_strided_slice %44 {offsets = [0, 64], sizes = [8, 32], strides = [1, 1]} : vector<8x128xf32> to vector<8x32xf32>
    %58 = math.tanh %57 : vector<8x32xf32>
    %59 = vector.extract_strided_slice %44 {offsets = [0, 96], sizes = [8, 32], strides = [1, 1]} : vector<8x128xf32> to vector<8x32xf32>
    %60 = arith.negf %59 : vector<8x32xf32>
    %61 = math.exp %60 : vector<8x32xf32>
    %cst_19 = arith.constant 1.000000e+00 : f32
    %62 = vector.broadcast %cst_19 : f32 to vector<8x32xf32>
    %63 = arith.addf %62, %61 : vector<8x32xf32>
    %64 = arith.divf %62, %63 : vector<8x32xf32>
    %65 = arith.mulf %56, %38 : vector<8x32xf32>
    %66 = arith.mulf %50, %58 : vector<8x32xf32>
    %67 = arith.addf %65, %66 : vector<8x32xf32>
    %68 = math.tanh %67 : vector<8x32xf32>
    %69 = arith.mulf %64, %68 : vector<8x32xf32>
    %70 = vector.extract_strided_slice %11 {offsets = [2, 0, 0], sizes = [1, 8, 128], strides = [1, 1, 1]} : vector<8x8x128xf32> to vector<1x8x128xf32>
    %71 = vector.shape_cast %70 : vector<1x8x128xf32> to vector<8x128xf32>
    %cst_20 = arith.constant dense<0.000000e+00> : vector<8x128xf32>
    %72 = tpu.matmul %69, %2, %cst_20 {dimension_numbers = #tpu.dot_dimension_numbers<[1], [0], [0], [1], [0, 0, 1, 1], [], []>} : vector<8x32xf32>, vector<32x128xf32>, vector<8x128xf32> -> vector<8x128xf32>
    %73 = arith.addf %71, %72 : vector<8x128xf32>
    %74 = vector.extract_strided_slice %73 {offsets = [0, 0], sizes = [8, 32], strides = [1, 1]} : vector<8x128xf32> to vector<8x32xf32>
    %75 = arith.negf %74 : vector<8x32xf32>
    %76 = math.exp %75 : vector<8x32xf32>
    %cst_21 = arith.constant 1.000000e+00 : f32
    %77 = vector.broadcast %cst_21 : f32 to vector<8x32xf32>
    %78 = arith.addf %77, %76 : vector<8x32xf32>
    %79 = arith.divf %77, %78 : vector<8x32xf32>
    %80 = vector.extract_strided_slice %73 {offsets = [0, 32], sizes = [8, 32], strides = [1, 1]} : vector<8x128xf32> to vector<8x32xf32>
    %81 = arith.negf %80 : vector<8x32xf32>
    %82 = math.exp %81 : vector<8x32xf32>
    %cst_22 = arith.constant 1.000000e+00 : f32
    %83 = vector.broadcast %cst_22 : f32 to vector<8x32xf32>
    %84 = arith.addf %83, %82 : vector<8x32xf32>
    %85 = arith.divf %83, %84 : vector<8x32xf32>
    %86 = vector.extract_strided_slice %73 {offsets = [0, 64], sizes = [8, 32], strides = [1, 1]} : vector<8x128xf32> to vector<8x32xf32>
    %87 = math.tanh %86 : vector<8x32xf32>
    %88 = vector.extract_strided_slice %73 {offsets = [0, 96], sizes = [8, 32], strides = [1, 1]} : vector<8x128xf32> to vector<8x32xf32>
    %89 = arith.negf %88 : vector<8x32xf32>
    %90 = math.exp %89 : vector<8x32xf32>
    %cst_23 = arith.constant 1.000000e+00 : f32
    %91 = vector.broadcast %cst_23 : f32 to vector<8x32xf32>
    %92 = arith.addf %91, %90 : vector<8x32xf32>
    %93 = arith.divf %91, %92 : vector<8x32xf32>
    %94 = arith.mulf %85, %67 : vector<8x32xf32>
    %95 = arith.mulf %79, %87 : vector<8x32xf32>
    %96 = arith.addf %94, %95 : vector<8x32xf32>
    %97 = math.tanh %96 : vector<8x32xf32>
    %98 = arith.mulf %93, %97 : vector<8x32xf32>
    %99 = vector.extract_strided_slice %11 {offsets = [3, 0, 0], sizes = [1, 8, 128], strides = [1, 1, 1]} : vector<8x8x128xf32> to vector<1x8x128xf32>
    %100 = vector.shape_cast %99 : vector<1x8x128xf32> to vector<8x128xf32>
    %cst_24 = arith.constant dense<0.000000e+00> : vector<8x128xf32>
    %101 = tpu.matmul %98, %2, %cst_24 {dimension_numbers = #tpu.dot_dimension_numbers<[1], [0], [0], [1], [0, 0, 1, 1], [], []>} : vector<8x32xf32>, vector<32x128xf32>, vector<8x128xf32> -> vector<8x128xf32>
    %102 = arith.addf %100, %101 : vector<8x128xf32>
    %103 = vector.extract_strided_slice %102 {offsets = [0, 0], sizes = [8, 32], strides = [1, 1]} : vector<8x128xf32> to vector<8x32xf32>
    %104 = arith.negf %103 : vector<8x32xf32>
    %105 = math.exp %104 : vector<8x32xf32>
    %cst_25 = arith.constant 1.000000e+00 : f32
    %106 = vector.broadcast %cst_25 : f32 to vector<8x32xf32>
    %107 = arith.addf %106, %105 : vector<8x32xf32>
    %108 = arith.divf %106, %107 : vector<8x32xf32>
    %109 = vector.extract_strided_slice %102 {offsets = [0, 32], sizes = [8, 32], strides = [1, 1]} : vector<8x128xf32> to vector<8x32xf32>
    %110 = arith.negf %109 : vector<8x32xf32>
    %111 = math.exp %110 : vector<8x32xf32>
    %cst_26 = arith.constant 1.000000e+00 : f32
    %112 = vector.broadcast %cst_26 : f32 to vector<8x32xf32>
    %113 = arith.addf %112, %111 : vector<8x32xf32>
    %114 = arith.divf %112, %113 : vector<8x32xf32>
    %115 = vector.extract_strided_slice %102 {offsets = [0, 64], sizes = [8, 32], strides = [1, 1]} : vector<8x128xf32> to vector<8x32xf32>
    %116 = math.tanh %115 : vector<8x32xf32>
    %117 = vector.extract_strided_slice %102 {offsets = [0, 96], sizes = [8, 32], strides = [1, 1]} : vector<8x128xf32> to vector<8x32xf32>
    %118 = arith.negf %117 : vector<8x32xf32>
    %119 = math.exp %118 : vector<8x32xf32>
    %cst_27 = arith.constant 1.000000e+00 : f32
    %120 = vector.broadcast %cst_27 : f32 to vector<8x32xf32>
    %121 = arith.addf %120, %119 : vector<8x32xf32>
    %122 = arith.divf %120, %121 : vector<8x32xf32>
    %123 = arith.mulf %114, %96 : vector<8x32xf32>
    %124 = arith.mulf %108, %116 : vector<8x32xf32>
    %125 = arith.addf %123, %124 : vector<8x32xf32>
    %126 = math.tanh %125 : vector<8x32xf32>
    %127 = arith.mulf %122, %126 : vector<8x32xf32>
    %128 = vector.extract_strided_slice %11 {offsets = [4, 0, 0], sizes = [1, 8, 128], strides = [1, 1, 1]} : vector<8x8x128xf32> to vector<1x8x128xf32>
    %129 = vector.shape_cast %128 : vector<1x8x128xf32> to vector<8x128xf32>
    %cst_28 = arith.constant dense<0.000000e+00> : vector<8x128xf32>
    %130 = tpu.matmul %127, %2, %cst_28 {dimension_numbers = #tpu.dot_dimension_numbers<[1], [0], [0], [1], [0, 0, 1, 1], [], []>} : vector<8x32xf32>, vector<32x128xf32>, vector<8x128xf32> -> vector<8x128xf32>
    %131 = arith.addf %129, %130 : vector<8x128xf32>
    %132 = vector.extract_strided_slice %131 {offsets = [0, 0], sizes = [8, 32], strides = [1, 1]} : vector<8x128xf32> to vector<8x32xf32>
    %133 = arith.negf %132 : vector<8x32xf32>
    %134 = math.exp %133 : vector<8x32xf32>
    %cst_29 = arith.constant 1.000000e+00 : f32
    %135 = vector.broadcast %cst_29 : f32 to vector<8x32xf32>
    %136 = arith.addf %135, %134 : vector<8x32xf32>
    %137 = arith.divf %135, %136 : vector<8x32xf32>
    %138 = vector.extract_strided_slice %131 {offsets = [0, 32], sizes = [8, 32], strides = [1, 1]} : vector<8x128xf32> to vector<8x32xf32>
    %139 = arith.negf %138 : vector<8x32xf32>
    %140 = math.exp %139 : vector<8x32xf32>
    %cst_30 = arith.constant 1.000000e+00 : f32
    %141 = vector.broadcast %cst_30 : f32 to vector<8x32xf32>
    %142 = arith.addf %141, %140 : vector<8x32xf32>
    %143 = arith.divf %141, %142 : vector<8x32xf32>
    %144 = vector.extract_strided_slice %131 {offsets = [0, 64], sizes = [8, 32], strides = [1, 1]} : vector<8x128xf32> to vector<8x32xf32>
    %145 = math.tanh %144 : vector<8x32xf32>
    %146 = vector.extract_strided_slice %131 {offsets = [0, 96], sizes = [8, 32], strides = [1, 1]} : vector<8x128xf32> to vector<8x32xf32>
    %147 = arith.negf %146 : vector<8x32xf32>
    %148 = math.exp %147 : vector<8x32xf32>
    %cst_31 = arith.constant 1.000000e+00 : f32
    %149 = vector.broadcast %cst_31 : f32 to vector<8x32xf32>
    %150 = arith.addf %149, %148 : vector<8x32xf32>
    %151 = arith.divf %149, %150 : vector<8x32xf32>
    %152 = arith.mulf %143, %125 : vector<8x32xf32>
    %153 = arith.mulf %137, %145 : vector<8x32xf32>
    %154 = arith.addf %152, %153 : vector<8x32xf32>
    %155 = math.tanh %154 : vector<8x32xf32>
    %156 = arith.mulf %151, %155 : vector<8x32xf32>
    %157 = vector.extract_strided_slice %11 {offsets = [5, 0, 0], sizes = [1, 8, 128], strides = [1, 1, 1]} : vector<8x8x128xf32> to vector<1x8x128xf32>
    %158 = vector.shape_cast %157 : vector<1x8x128xf32> to vector<8x128xf32>
    %cst_32 = arith.constant dense<0.000000e+00> : vector<8x128xf32>
    %159 = tpu.matmul %156, %2, %cst_32 {dimension_numbers = #tpu.dot_dimension_numbers<[1], [0], [0], [1], [0, 0, 1, 1], [], []>} : vector<8x32xf32>, vector<32x128xf32>, vector<8x128xf32> -> vector<8x128xf32>
    %160 = arith.addf %158, %159 : vector<8x128xf32>
    %161 = vector.extract_strided_slice %160 {offsets = [0, 0], sizes = [8, 32], strides = [1, 1]} : vector<8x128xf32> to vector<8x32xf32>
    %162 = arith.negf %161 : vector<8x32xf32>
    %163 = math.exp %162 : vector<8x32xf32>
    %cst_33 = arith.constant 1.000000e+00 : f32
    %164 = vector.broadcast %cst_33 : f32 to vector<8x32xf32>
    %165 = arith.addf %164, %163 : vector<8x32xf32>
    %166 = arith.divf %164, %165 : vector<8x32xf32>
    %167 = vector.extract_strided_slice %160 {offsets = [0, 32], sizes = [8, 32], strides = [1, 1]} : vector<8x128xf32> to vector<8x32xf32>
    %168 = arith.negf %167 : vector<8x32xf32>
    %169 = math.exp %168 : vector<8x32xf32>
    %cst_34 = arith.constant 1.000000e+00 : f32
    %170 = vector.broadcast %cst_34 : f32 to vector<8x32xf32>
    %171 = arith.addf %170, %169 : vector<8x32xf32>
    %172 = arith.divf %170, %171 : vector<8x32xf32>
    %173 = vector.extract_strided_slice %160 {offsets = [0, 64], sizes = [8, 32], strides = [1, 1]} : vector<8x128xf32> to vector<8x32xf32>
    %174 = math.tanh %173 : vector<8x32xf32>
    %175 = vector.extract_strided_slice %160 {offsets = [0, 96], sizes = [8, 32], strides = [1, 1]} : vector<8x128xf32> to vector<8x32xf32>
    %176 = arith.negf %175 : vector<8x32xf32>
    %177 = math.exp %176 : vector<8x32xf32>
    %cst_35 = arith.constant 1.000000e+00 : f32
    %178 = vector.broadcast %cst_35 : f32 to vector<8x32xf32>
    %179 = arith.addf %178, %177 : vector<8x32xf32>
    %180 = arith.divf %178, %179 : vector<8x32xf32>
    %181 = arith.mulf %172, %154 : vector<8x32xf32>
    %182 = arith.mulf %166, %174 : vector<8x32xf32>
    %183 = arith.addf %181, %182 : vector<8x32xf32>
    %184 = math.tanh %183 : vector<8x32xf32>
    %185 = arith.mulf %180, %184 : vector<8x32xf32>
    %186 = vector.extract_strided_slice %11 {offsets = [6, 0, 0], sizes = [1, 8, 128], strides = [1, 1, 1]} : vector<8x8x128xf32> to vector<1x8x128xf32>
    %187 = vector.shape_cast %186 : vector<1x8x128xf32> to vector<8x128xf32>
    %cst_36 = arith.constant dense<0.000000e+00> : vector<8x128xf32>
    %188 = tpu.matmul %185, %2, %cst_36 {dimension_numbers = #tpu.dot_dimension_numbers<[1], [0], [0], [1], [0, 0, 1, 1], [], []>} : vector<8x32xf32>, vector<32x128xf32>, vector<8x128xf32> -> vector<8x128xf32>
    %189 = arith.addf %187, %188 : vector<8x128xf32>
    %190 = vector.extract_strided_slice %189 {offsets = [0, 0], sizes = [8, 32], strides = [1, 1]} : vector<8x128xf32> to vector<8x32xf32>
    %191 = arith.negf %190 : vector<8x32xf32>
    %192 = math.exp %191 : vector<8x32xf32>
    %cst_37 = arith.constant 1.000000e+00 : f32
    %193 = vector.broadcast %cst_37 : f32 to vector<8x32xf32>
    %194 = arith.addf %193, %192 : vector<8x32xf32>
    %195 = arith.divf %193, %194 : vector<8x32xf32>
    %196 = vector.extract_strided_slice %189 {offsets = [0, 32], sizes = [8, 32], strides = [1, 1]} : vector<8x128xf32> to vector<8x32xf32>
    %197 = arith.negf %196 : vector<8x32xf32>
    %198 = math.exp %197 : vector<8x32xf32>
    %cst_38 = arith.constant 1.000000e+00 : f32
    %199 = vector.broadcast %cst_38 : f32 to vector<8x32xf32>
    %200 = arith.addf %199, %198 : vector<8x32xf32>
    %201 = arith.divf %199, %200 : vector<8x32xf32>
    %202 = vector.extract_strided_slice %189 {offsets = [0, 64], sizes = [8, 32], strides = [1, 1]} : vector<8x128xf32> to vector<8x32xf32>
    %203 = math.tanh %202 : vector<8x32xf32>
    %204 = vector.extract_strided_slice %189 {offsets = [0, 96], sizes = [8, 32], strides = [1, 1]} : vector<8x128xf32> to vector<8x32xf32>
    %205 = arith.negf %204 : vector<8x32xf32>
    %206 = math.exp %205 : vector<8x32xf32>
    %cst_39 = arith.constant 1.000000e+00 : f32
    %207 = vector.broadcast %cst_39 : f32 to vector<8x32xf32>
    %208 = arith.addf %207, %206 : vector<8x32xf32>
    %209 = arith.divf %207, %208 : vector<8x32xf32>
    %210 = arith.mulf %201, %183 : vector<8x32xf32>
    %211 = arith.mulf %195, %203 : vector<8x32xf32>
    %212 = arith.addf %210, %211 : vector<8x32xf32>
    %213 = math.tanh %212 : vector<8x32xf32>
    %214 = arith.mulf %209, %213 : vector<8x32xf32>
    %215 = vector.extract_strided_slice %11 {offsets = [7, 0, 0], sizes = [1, 8, 128], strides = [1, 1, 1]} : vector<8x8x128xf32> to vector<1x8x128xf32>
    %216 = vector.shape_cast %215 : vector<1x8x128xf32> to vector<8x128xf32>
    %cst_40 = arith.constant dense<0.000000e+00> : vector<8x128xf32>
    %217 = tpu.matmul %214, %2, %cst_40 {dimension_numbers = #tpu.dot_dimension_numbers<[1], [0], [0], [1], [0, 0, 1, 1], [], []>} : vector<8x32xf32>, vector<32x128xf32>, vector<8x128xf32> -> vector<8x128xf32>
    %218 = arith.addf %216, %217 : vector<8x128xf32>
    %219 = vector.extract_strided_slice %218 {offsets = [0, 0], sizes = [8, 32], strides = [1, 1]} : vector<8x128xf32> to vector<8x32xf32>
    %220 = arith.negf %219 : vector<8x32xf32>
    %221 = math.exp %220 : vector<8x32xf32>
    %cst_41 = arith.constant 1.000000e+00 : f32
    %222 = vector.broadcast %cst_41 : f32 to vector<8x32xf32>
    %223 = arith.addf %222, %221 : vector<8x32xf32>
    %224 = arith.divf %222, %223 : vector<8x32xf32>
    %225 = vector.extract_strided_slice %218 {offsets = [0, 32], sizes = [8, 32], strides = [1, 1]} : vector<8x128xf32> to vector<8x32xf32>
    %226 = arith.negf %225 : vector<8x32xf32>
    %227 = math.exp %226 : vector<8x32xf32>
    %cst_42 = arith.constant 1.000000e+00 : f32
    %228 = vector.broadcast %cst_42 : f32 to vector<8x32xf32>
    %229 = arith.addf %228, %227 : vector<8x32xf32>
    %230 = arith.divf %228, %229 : vector<8x32xf32>
    %231 = vector.extract_strided_slice %218 {offsets = [0, 64], sizes = [8, 32], strides = [1, 1]} : vector<8x128xf32> to vector<8x32xf32>
    %232 = math.tanh %231 : vector<8x32xf32>
    %233 = vector.extract_strided_slice %218 {offsets = [0, 96], sizes = [8, 32], strides = [1, 1]} : vector<8x128xf32> to vector<8x32xf32>
    %234 = arith.negf %233 : vector<8x32xf32>
    %235 = math.exp %234 : vector<8x32xf32>
    %cst_43 = arith.constant 1.000000e+00 : f32
    %236 = vector.broadcast %cst_43 : f32 to vector<8x32xf32>
    %237 = arith.addf %236, %235 : vector<8x32xf32>
    %238 = arith.divf %236, %237 : vector<8x32xf32>
    %239 = arith.mulf %230, %212 : vector<8x32xf32>
    %240 = arith.mulf %224, %232 : vector<8x32xf32>
    %241 = arith.addf %239, %240 : vector<8x32xf32>
    %242 = math.tanh %241 : vector<8x32xf32>
    %243 = arith.mulf %238, %242 : vector<8x32xf32>
    %c0_44 = arith.constant 0 : index
    %c0_45 = arith.constant 0 : index
    %244 = vector.load %arg6[%c0_44, %c0_45] : memref<32x32xf32, #tpu.memory_space<vmem>>, vector<32x32xf32>
    %cst_46 = arith.constant dense<0.000000e+00> : vector<8x32xf32>
    %245 = tpu.matmul %243, %244, %cst_46 {dimension_numbers = #tpu.dot_dimension_numbers<[1], [0], [0], [1], [0, 0, 1, 1], [], []>} : vector<8x32xf32>, vector<32x32xf32>, vector<8x32xf32> -> vector<8x32xf32>
    %c0_47 = arith.constant 0 : index
    %c0_48 = arith.constant 0 : index
    %246 = vector.load %arg7[%c0_47, %c0_48] : memref<1x32xf32, #tpu.memory_space<vmem>>, vector<1x32xf32>
    %247 = vector.broadcast %246 : vector<1x32xf32> to vector<8x32xf32>
    %248 = arith.addf %245, %247 : vector<8x32xf32>
    %c0_49 = arith.constant 0 : index
    %c0_50 = arith.constant 0 : index
    %249 = vector.load %arg5[%c0_49, %c0_50] : memref<2x32xf32, #tpu.memory_space<vmem>>, vector<2x32xf32>
    %250 = vector.extract_strided_slice %0 {offsets = [0, 0], sizes = [8, 1], strides = [1, 1]} : vector<8x2xf32> to vector<8x1xf32>
    %251 = vector.extract_strided_slice %249 {offsets = [0, 0], sizes = [1, 32], strides = [1, 1]} : vector<2x32xf32> to vector<1x32xf32>
    %252 = vector.broadcast %250 : vector<8x1xf32> to vector<8x32xf32>
    %253 = vector.broadcast %251 : vector<1x32xf32> to vector<8x32xf32>
    %254 = arith.mulf %252, %253 : vector<8x32xf32>
    %255 = arith.addf %248, %254 : vector<8x32xf32>
    %256 = vector.extract_strided_slice %0 {offsets = [0, 1], sizes = [8, 1], strides = [1, 1]} : vector<8x2xf32> to vector<8x1xf32>
    %257 = vector.extract_strided_slice %249 {offsets = [1, 0], sizes = [1, 32], strides = [1, 1]} : vector<2x32xf32> to vector<1x32xf32>
    %258 = vector.broadcast %256 : vector<8x1xf32> to vector<8x32xf32>
    %259 = vector.broadcast %257 : vector<1x32xf32> to vector<8x32xf32>
    %260 = arith.mulf %258, %259 : vector<8x32xf32>
    %261 = arith.addf %255, %260 : vector<8x32xf32>
    %c0_51 = arith.constant 0 : index
    %c0_52 = arith.constant 0 : index
    %262 = vector.load %arg8[%c0_51, %c0_52] : memref<1x32xf32, #tpu.memory_space<vmem>>, vector<1x32xf32>
    %c0_53 = arith.constant 0 : index
    %c0_54 = arith.constant 0 : index
    %263 = vector.load %arg9[%c0_53, %c0_54] : memref<1x32xf32, #tpu.memory_space<vmem>>, vector<1x32xf32>
    %cst_55 = arith.constant dense<0.000000e+00> : vector<8xf32>
    %264 = vector.multi_reduction <add>, %261, %cst_55 [1] : vector<8x32xf32> to vector<8xf32>
    %265 = vector.shape_cast %264 : vector<8xf32> to vector<8x1xf32>
    %cst_56 = arith.constant 3.200000e+01 : f32
    %266 = vector.broadcast %cst_56 : f32 to vector<8x1xf32>
    %267 = arith.divf %265, %266 : vector<8x1xf32>
    %268 = vector.broadcast %267 : vector<8x1xf32> to vector<8x32xf32>
    %269 = arith.subf %261, %268 : vector<8x32xf32>
    %270 = arith.mulf %269, %269 : vector<8x32xf32>
    %cst_57 = arith.constant dense<0.000000e+00> : vector<8xf32>
    %271 = vector.multi_reduction <add>, %270, %cst_57 [1] : vector<8x32xf32> to vector<8xf32>
    %272 = vector.shape_cast %271 : vector<8xf32> to vector<8x1xf32>
    %cst_58 = arith.constant 3.200000e+01 : f32
    %273 = vector.broadcast %cst_58 : f32 to vector<8x1xf32>
    %274 = arith.divf %272, %273 : vector<8x1xf32>
    %275 = vector.broadcast %267 : vector<8x1xf32> to vector<8x32xf32>
    %276 = arith.subf %261, %275 : vector<8x32xf32>
    %cst_59 = arith.constant 9.99999974E-6 : f32
    %277 = vector.broadcast %cst_59 : f32 to vector<8x1xf32>
    %278 = arith.addf %274, %277 : vector<8x1xf32>
    %279 = math.rsqrt %278 : vector<8x1xf32>
    %280 = vector.broadcast %279 : vector<8x1xf32> to vector<8x32xf32>
    %281 = arith.mulf %276, %280 : vector<8x32xf32>
    %282 = vector.broadcast %262 : vector<1x32xf32> to vector<8x32xf32>
    %283 = arith.mulf %281, %282 : vector<8x32xf32>
    %284 = vector.broadcast %263 : vector<1x32xf32> to vector<8x32xf32>
    %285 = arith.addf %283, %284 : vector<8x32xf32>
    %cst_60 = arith.constant 0.000000e+00 : f32
    %286 = vector.broadcast %cst_60 : f32 to vector<8x32xf32>
    %287 = arith.maximumf %285, %286 : vector<8x32xf32>
    %c0_61 = arith.constant 0 : index
    %c0_62 = arith.constant 0 : index
    %288 = vector.load %arg10[%c0_61, %c0_62] : memref<32x32xf32, #tpu.memory_space<vmem>>, vector<32x32xf32>
    %cst_63 = arith.constant dense<0.000000e+00> : vector<8x32xf32>
    %289 = tpu.matmul %287, %288, %cst_63 {dimension_numbers = #tpu.dot_dimension_numbers<[1], [0], [0], [1], [0, 0, 1, 1], [], []>} : vector<8x32xf32>, vector<32x32xf32>, vector<8x32xf32> -> vector<8x32xf32>
    %c0_64 = arith.constant 0 : index
    %c0_65 = arith.constant 0 : index
    %290 = vector.load %arg11[%c0_64, %c0_65] : memref<1x32xf32, #tpu.memory_space<vmem>>, vector<1x32xf32>
    %291 = vector.broadcast %290 : vector<1x32xf32> to vector<8x32xf32>
    %292 = arith.addf %289, %291 : vector<8x32xf32>
    %c0_66 = arith.constant 0 : index
    %c0_67 = arith.constant 0 : index
    %293 = vector.load %arg12[%c0_66, %c0_67] : memref<1x32xf32, #tpu.memory_space<vmem>>, vector<1x32xf32>
    %c0_68 = arith.constant 0 : index
    %c0_69 = arith.constant 0 : index
    %294 = vector.load %arg13[%c0_68, %c0_69] : memref<1x32xf32, #tpu.memory_space<vmem>>, vector<1x32xf32>
    %cst_70 = arith.constant dense<0.000000e+00> : vector<8xf32>
    %295 = vector.multi_reduction <add>, %292, %cst_70 [1] : vector<8x32xf32> to vector<8xf32>
    %296 = vector.shape_cast %295 : vector<8xf32> to vector<8x1xf32>
    %cst_71 = arith.constant 3.200000e+01 : f32
    %297 = vector.broadcast %cst_71 : f32 to vector<8x1xf32>
    %298 = arith.divf %296, %297 : vector<8x1xf32>
    %299 = vector.broadcast %298 : vector<8x1xf32> to vector<8x32xf32>
    %300 = arith.subf %292, %299 : vector<8x32xf32>
    %301 = arith.mulf %300, %300 : vector<8x32xf32>
    %cst_72 = arith.constant dense<0.000000e+00> : vector<8xf32>
    %302 = vector.multi_reduction <add>, %301, %cst_72 [1] : vector<8x32xf32> to vector<8xf32>
    %303 = vector.shape_cast %302 : vector<8xf32> to vector<8x1xf32>
    %cst_73 = arith.constant 3.200000e+01 : f32
    %304 = vector.broadcast %cst_73 : f32 to vector<8x1xf32>
    %305 = arith.divf %303, %304 : vector<8x1xf32>
    %306 = vector.broadcast %298 : vector<8x1xf32> to vector<8x32xf32>
    %307 = arith.subf %292, %306 : vector<8x32xf32>
    %cst_74 = arith.constant 9.99999974E-6 : f32
    %308 = vector.broadcast %cst_74 : f32 to vector<8x1xf32>
    %309 = arith.addf %305, %308 : vector<8x1xf32>
    %310 = math.rsqrt %309 : vector<8x1xf32>
    %311 = vector.broadcast %310 : vector<8x1xf32> to vector<8x32xf32>
    %312 = arith.mulf %307, %311 : vector<8x32xf32>
    %313 = vector.broadcast %293 : vector<1x32xf32> to vector<8x32xf32>
    %314 = arith.mulf %312, %313 : vector<8x32xf32>
    %315 = vector.broadcast %294 : vector<1x32xf32> to vector<8x32xf32>
    %316 = arith.addf %314, %315 : vector<8x32xf32>
    %cst_75 = arith.constant 0.000000e+00 : f32
    %317 = vector.broadcast %cst_75 : f32 to vector<8x32xf32>
    %318 = arith.maximumf %316, %317 : vector<8x32xf32>
    %c0_76 = arith.constant 0 : index
    %c0_77 = arith.constant 0 : index
    %319 = vector.load %arg14[%c0_76, %c0_77] : memref<32x2xf32, #tpu.memory_space<vmem>>, vector<32x2xf32>
    %cst_78 = arith.constant dense<0.000000e+00> : vector<8x2xf32>
    %320 = tpu.matmul %318, %319, %cst_78 {dimension_numbers = #tpu.dot_dimension_numbers<[1], [0], [0], [1], [0, 0, 1, 1], [], []>} : vector<8x32xf32>, vector<32x2xf32>, vector<8x2xf32> -> vector<8x2xf32>
    %c0_79 = arith.constant 0 : index
    %c0_80 = arith.constant 0 : index
    %321 = vector.load %arg15[%c0_79, %c0_80] : memref<1x2xf32, #tpu.memory_space<vmem>>, vector<1x2xf32>
    %322 = vector.broadcast %321 : vector<1x2xf32> to vector<8x2xf32>
    %323 = arith.addf %320, %322 : vector<8x2xf32>
    %324 = math.tanh %323 : vector<8x2xf32>
    %cst_81 = arith.constant 1.000000e+00 : f32
    %325 = vector.broadcast %cst_81 : f32 to vector<8x2xf32>
    %326 = arith.mulf %324, %325 : vector<8x2xf32>
    %c0_82 = arith.constant 0 : index
    %c0_83 = arith.constant 0 : index
    %327 = vector.load %arg16[%c0_82, %c0_83] : memref<8x2xf32, #tpu.memory_space<vmem>>, vector<8x2xf32>
    tpu.vector_store %arg16[%c0_82, %c0_83], %326 {strides = array<i32>} : memref<8x2xf32, #tpu.memory_space<vmem>>, vector<8x2xf32>,
    return
  }
}

</mosaic_0001>

<llo_original>
// kernel: tpu_custom_call.1
$region0: #{tpu_custom_call.1}
  #allocation0 [shape = 'u32[]', space=smem, size = 0x4, offset = 0x4, fixed_abs, tag = 'smem constant byte address 0x4 - core index']
  #allocation1 [shape = 'u32[144,128]{1,0:T(1,128)}', space=vmem, size = 0x12000, scoped, tag = 'internal scratch']
  %s0 = inlined_call_operand.vmem [shape: f32[8,2], index: 0, kind: input, shape index: {}]
  %s1 = inlined_call_operand.hbm [shape: f32[8,8,8], index: 1, kind: input, shape index: {}]
  %s2 = inlined_call_operand.vmem [shape: f32[8,128], index: 2, kind: input, shape index: {}]
  %s3 = inlined_call_operand.vmem [shape: f32[32,128], index: 3, kind: input, shape index: {}]
  %s4 = inlined_call_operand.vmem [shape: f32[1,128], index: 4, kind: input, shape index: {}]
  %s5 = inlined_call_operand.vmem [shape: f32[2,32], index: 5, kind: input, shape index: {}]
  %s6 = inlined_call_operand.hbm [shape: f32[32,32], index: 6, kind: input, shape index: {}]
  %s7 = inlined_call_operand.vmem [shape: f32[1,32], index: 7, kind: input, shape index: {}]
  %s8 = inlined_call_operand.vmem [shape: f32[1,32], index: 8, kind: input, shape index: {}]
  %s9 = inlined_call_operand.vmem [shape: f32[1,32], index: 9, kind: input, shape index: {}]
  %s10 = inlined_call_operand.hbm [shape: f32[32,32], index: 10, kind: input, shape index: {}]
  %s11 = inlined_call_operand.vmem [shape: f32[1,32], index: 11, kind: input, shape index: {}]
  %s12 = inlined_call_operand.vmem [shape: f32[1,32], index: 12, kind: input, shape index: {}]
  %s13 = inlined_call_operand.vmem [shape: f32[1,32], index: 13, kind: input, shape index: {}]
  %s14 = inlined_call_operand.vmem [shape: f32[32,2], index: 14, kind: input, shape index: {}]
  %s15 = inlined_call_operand.vmem [shape: f32[1,2], index: 15, kind: input, shape index: {}]
  %s16 = inlined_call_operand.vmem [shape: f32[8,2], index: 16, kind: output, shape index: {}]
  %s17 = sld [smem:[#allocation0]]
  $region86: #{tpu_custom_call.1} parent=0
    _
  %s19 = ssub.s32 1, %s17
  %s20 = scalar_select 0, %s19, %s17
  $region1: #{tpu_custom_call.1} parent=0
    #allocation2 [shape = 'u8[32768]{0}', space=vmem, size = 0x8000, scoped, tag = 'input window, operand 1, single buffered']
    #allocation3 [shape = 's32[1]{0}', space=sflag, size = 0x4, scoped, tag = 'scoped memory for tpu_custom_call.1']
    #allocation4 [shape = 'u8[16384]{0}', space=vmem, size = 0x4000, scoped, tag = 'input window, operand 6, single buffered']
    #allocation5 [shape = 's32[1]{0}', space=sflag, size = 0x4, scoped, tag = 'scoped memory for tpu_custom_call.1']
    #allocation6 [shape = 'u8[16384]{0}', space=vmem, size = 0x4000, scoped, tag = 'input window, operand 10, single buffered']
    %21 = vsyncpa [#allocation3], 0
    %22 = vsyncpa [#allocation5], 0
    // Predicated region
    $region2: #{tpu_custom_call.1} parent=1 // pred_check
      _
    $region3: #{tpu_custom_call.1} parent=1 // pred_check_branch
      %24 = sbr.rel (0) target = $region5
    $region4: #{tpu_custom_call.1} parent=1 // pred_region
      _
    $region5: #{tpu_custom_call.1} parent=1 // pred_fallthru
      _
    // Predicated region
    $region6: #{tpu_custom_call.1} parent=1 // pred_check
      _
    $region7: #{tpu_custom_call.1} parent=1 // pred_check_branch
      %26 = sbr.rel (0) target = $region9
    $region8: #{tpu_custom_call.1} parent=1 // pred_region
      %s28 = ssub.s32 1024, 1024
      %29 = vsyncadd [#allocation3], %s28
      %s30 = sshll.u32 [#allocation2], 4
      %s31 = int_to_ptr.vmem [resolvable:$true] %s30
      %36 = dma.hbm_to_vmem [thread:$0]  %s1, 1024, %s31, [#allocation3], 128, 128, 8
    $region9: #{tpu_custom_call.1} parent=1 // pred_fallthru
      _
    // Predicated region
    $region10: #{tpu_custom_call.1} parent=1 // pred_check
      _
    $region11: #{tpu_custom_call.1} parent=1 // pred_check_branch
      %38 = sbr.rel (0) target = $region13
    $region12: #{tpu_custom_call.1} parent=1 // pred_region
      _
    $region13: #{tpu_custom_call.1} parent=1 // pred_fallthru
      _
    // Predicated region
    $region14: #{tpu_custom_call.1} parent=1 // pred_check
      _
    $region15: #{tpu_custom_call.1} parent=1 // pred_check_branch
      %40 = sbr.rel (0) target = $region17
    $region16: #{tpu_custom_call.1} parent=1 // pred_region
      _
    $region17: #{tpu_custom_call.1} parent=1 // pred_fallthru
      _
    // Predicated region
    $region18: #{tpu_custom_call.1} parent=1 // pred_check
      _
    $region19: #{tpu_custom_call.1} parent=1 // pred_check_branch
      %42 = sbr.rel (0) target = $region21
    $region20: #{tpu_custom_call.1} parent=1 // pred_region
      _
    $region21: #{tpu_custom_call.1} parent=1 // pred_fallthru
      _
    // Predicated region
    $region22: #{tpu_custom_call.1} parent=1 // pred_check
      _
    $region23: #{tpu_custom_call.1} parent=1 // pred_check_branch
      %44 = sbr.rel (0) target = $region25
    $region24: #{tpu_custom_call.1} parent=1 // pred_region
      _
    $region25: #{tpu_custom_call.1} parent=1 // pred_fallthru
      _
    // Predicated region
    $region26: #{tpu_custom_call.1} parent=1 // pred_check
      _
    $region27: #{tpu_custom_call.1} parent=1 // pred_check_branch
      %46 = sbr.rel (0) target = $region29
    $region28: #{tpu_custom_call.1} parent=1 // pred_region
      %s48 = ssub.s32 512, 512
      %49 = vsyncadd [#allocation5], %s48
      %s50 = sshll.u32 [#allocation4], 4
      %s51 = int_to_ptr.vmem [resolvable:$true] %s50
      %56 = dma.hbm_to_vmem [thread:$0]  %s6, 512, %s51, [#allocation5], 128, 128, 8
    $region29: #{tpu_custom_call.1} parent=1 // pred_fallthru
      _
    // Predicated region
    $region30: #{tpu_custom_call.1} parent=1 // pred_check
      _
    $region31: #{tpu_custom_call.1} parent=1 // pred_check_branch
      %58 = sbr.rel (0) target = $region33
    $region32: #{tpu_custom_call.1} parent=1 // pred_region
      _
    $region33: #{tpu_custom_call.1} parent=1 // pred_fallthru
      _
    // Predicated region
    $region34: #{tpu_custom_call.1} parent=1 // pred_check
      _
    $region35: #{tpu_custom_call.1} parent=1 // pred_check_branch
      %60 = sbr.rel (0) target = $region37
    $region36: #{tpu_custom_call.1} parent=1 // pred_region
      _
    $region37: #{tpu_custom_call.1} parent=1 // pred_fallthru
      _
    // Predicated region
    $region38: #{tpu_custom_call.1} parent=1 // pred_check
      _
    $region39: #{tpu_custom_call.1} parent=1 // pred_check_branch
      %62 = sbr.rel (0) target = $region41
    $region40: #{tpu_custom_call.1} parent=1 // pred_region
      _
    $region41: #{tpu_custom_call.1} parent=1 // pred_fallthru
      _
    // Predicated region
    $region42: #{tpu_custom_call.1} parent=1 // pred_check
      _
    $region43: #{tpu_custom_call.1} parent=1 // pred_check_branch
      %64 = sbr.rel (0) target = $region45
    $region44: #{tpu_custom_call.1} parent=1 // pred_region
      %s66 = ssub.s32 512, 512
      %67 = vsyncadd [#allocation5], %s66
      %s68 = sshll.u32 [#allocation6], 4
      %s69 = int_to_ptr.vmem [resolvable:$true] %s68
      %74 = dma.hbm_to_vmem [thread:$0]  %s10, 512, %s69, [#allocation5], 128, 128, 8
    $region45: #{tpu_custom_call.1} parent=1 // pred_fallthru
      _
    // Predicated region
    $region46: #{tpu_custom_call.1} parent=1 // pred_check
      _
    $region47: #{tpu_custom_call.1} parent=1 // pred_check_branch
      %76 = sbr.rel (0) target = $region49
    $region48: #{tpu_custom_call.1} parent=1 // pred_region
      _
    $region49: #{tpu_custom_call.1} parent=1 // pred_fallthru
      _
    // Predicated region
    $region50: #{tpu_custom_call.1} parent=1 // pred_check
      _
    $region51: #{tpu_custom_call.1} parent=1 // pred_check_branch
      %78 = sbr.rel (0) target = $region53
    $region52: #{tpu_custom_call.1} parent=1 // pred_region
      _
    $region53: #{tpu_custom_call.1} parent=1 // pred_fallthru
      _
    // Predicated region
    $region54: #{tpu_custom_call.1} parent=1 // pred_check
      _
    $region55: #{tpu_custom_call.1} parent=1 // pred_check_branch
      %80 = sbr.rel (0) target = $region57
    $region56: #{tpu_custom_call.1} parent=1 // pred_region
      _
    $region57: #{tpu_custom_call.1} parent=1 // pred_fallthru
      _
    // Predicated region
    $region58: #{tpu_custom_call.1} parent=1 // pred_check
      _
    $region59: #{tpu_custom_call.1} parent=1 // pred_check_branch
      %82 = sbr.rel (0) target = $region61
    $region60: #{tpu_custom_call.1} parent=1 // pred_region
      _
    $region61: #{tpu_custom_call.1} parent=1 // pred_fallthru
      _
    // Predicated region
    $region62: #{tpu_custom_call.1} parent=1 // pred_check
      _
    $region63: #{tpu_custom_call.1} parent=1 // pred_check_branch
      %84 = sbr.rel (0) target = $region65
    $region64: #{tpu_custom_call.1} parent=1 // pred_region
      _
    $region65: #{tpu_custom_call.1} parent=1 // pred_fallthru
      _
    // Predicated region
    $region66: #{tpu_custom_call.1} parent=1 // pred_check
      _
    $region67: #{tpu_custom_call.1} parent=1 // pred_check_branch
      %86 = sbr.rel (0) target = $region69
    $region68: #{tpu_custom_call.1} parent=1 // pred_region
      %87 = dma.done [#allocation3], 1024
    $region69: #{tpu_custom_call.1} parent=1 // pred_fallthru
      _
    // Predicated region
    $region70: #{tpu_custom_call.1} parent=1 // pred_check
      _
    $region71: #{tpu_custom_call.1} parent=1 // pred_check_branch
      %89 = sbr.rel (0) target = $region73
    $region72: #{tpu_custom_call.1} parent=1 // pred_region
      %90 = dma.done [#allocation5], 512
    $region73: #{tpu_custom_call.1} parent=1 // pred_fallthru
      _
    // Predicated region
    $region74: #{tpu_custom_call.1} parent=1 // pred_check
      _
    $region75: #{tpu_custom_call.1} parent=1 // pred_check_branch
      %92 = sbr.rel (0) target = $region77
    $region76: #{tpu_custom_call.1} parent=1 // pred_region
      %93 = dma.done [#allocation5], 512
    $region77: #{tpu_custom_call.1} parent=1 // pred_fallthru
      _
    %v94 = vld [vmem:[%s0] sm:$0xff]
    %v95 = vld [vmem:[%s2] sm:$0xff]
    %v96 = vld [vmem:[%s3] sm:$0xff]
    %v97 = vld [vmem:[%s3 + $0x8] sm:$0xff]
    %v98 = vld [vmem:[%s3 + $0x10] sm:$0xff]
    %v99 = vld [vmem:[%s3 + $0x18] sm:$0xff]
    %v100 = vld [vmem:[%s4] sm:$0x1]
    %v101 = vld [vmem:[#allocation2] sm:$0xff]
    %v102 = vld [vmem:[#allocation2 + $0x8] sm:$0xff]
    %v103 = vld [vmem:[#allocation2 + $0x10] sm:$0xff]
    %v104 = vld [vmem:[#allocation2 + $0x18] sm:$0xff]
    %v105 = vld [vmem:[#allocation2 + $0x20] sm:$0xff]
    %v106 = vld [vmem:[#allocation2 + $0x28] sm:$0xff]
    %v107 = vld [vmem:[#allocation2 + $0x30] sm:$0xff]
    %v108 = vld [vmem:[#allocation2 + $0x38] sm:$0xff]
    %v110 = vlaneseq
    %v111 = vshrl.u32 %v110, 7
    %v112 = vsub.s32 0, %v111
    %v113 = vrot.slane %v100, %v112
    %vm115 = vcmask 64512
    %v117 = vsel %vm115, %v101, 0
    %v120 = vsel %vm115, %v102, 0
    %v123 = vsel %vm115, %v103, 0
    %v126 = vsel %vm115, %v104, 0
    %v129 = vsel %vm115, %v105, 0
    %v132 = vsel %vm115, %v106, 0
    %v135 = vsel %vm115, %v107, 0
    %v138 = vsel %vm115, %v108, 0
    %140 = vmatprep.subr.mxu0 0.0
    %141 = vmatpush1.msra.mxu0 0.0
    %142 = vmatprep.subr.mxu0 0.0
    %143 = vmatpush1.msra.mxu0 0.0
    %144 = vmatprep.subr.mxu0 0.0
    %145 = vmatpush1.msra.mxu0 0.0
    %146 = vmatprep.subr.mxu0 0.0
    %147 = vmatpush1.msra.mxu0 0.0
    %148 = vmatprep.subr.mxu0 0.0
    %149 = vmatpush1.msra.mxu0 0.0
    %150 = vmatprep.subr.mxu0 0.0
    %151 = vmatpush1.msra.mxu0 0.0
    %152 = vmatprep.subr.mxu0 0.0
    %153 = vmatpush1.msra.mxu0 0.0
    %154 = vmatprep.subr.mxu0 0.0
    %155 = vmatpush1.msra.mxu0 0.0
    %156 = vmatprep.subr.mxu0 0.0
    %157 = vmatpush1.msra.mxu0 0.0
    %158 = vmatprep.subr.mxu0 0.0
    %159 = vmatpush1.msra.mxu0 0.0
    %160 = vmatprep.subr.mxu0 0.0
    %161 = vmatpush1.msra.mxu0 0.0
    %162 = vmatprep.subr.mxu0 0.0
    %163 = vmatpush1.msra.mxu0 0.0
    %164 = vmatprep.subr.mxu0 0.0
    %165 = vmatpush1.msra.mxu0 0.0
    %166 = vmatprep.subr.mxu0 0.0
    %167 = vmatpush1.msra.mxu0 0.0
    %168 = vmatprep.subr.mxu0 0.0
    %169 = vmatpush1.msra.mxu0 0.0
    %170 = vmatprep.subr.mxu0 0.0
    %171 = vmatpush1.msra.mxu0 %v95
    %172 = vmatprep.subr.mxu0 0.0
    %173 = vmatpush2.msra.mxu0 0.0
    %174 = vmatprep.subr.mxu0 0.0
    %175 = vmatpush2.msra.mxu0 0.0
    %176 = vmatprep.subr.mxu0 0.0
    %177 = vmatpush2.msra.mxu0 0.0
    %178 = vmatprep.subr.mxu0 0.0
    %179 = vmatpush2.msra.mxu0 0.0
    %180 = vmatprep.subr.mxu0 0.0
    %181 = vmatpush2.msra.mxu0 0.0
    %182 = vmatprep.subr.mxu0 0.0
    %183 = vmatpush2.msra.mxu0 0.0
    %184 = vmatprep.subr.mxu0 0.0
    %185 = vmatpush2.msra.mxu0 0.0
    %186 = vmatprep.subr.mxu0 0.0
    %187 = vmatpush2.msra.mxu0 0.0
    %188 = vmatprep.subr.mxu0 0.0
    %189 = vmatpush2.msra.mxu0 0.0
    %190 = vmatprep.subr.mxu0 0.0
    %191 = vmatpush2.msra.mxu0 0.0
    %192 = vmatprep.subr.mxu0 0.0
    %193 = vmatpush2.msra.mxu0 0.0
    %194 = vmatprep.subr.mxu0 0.0
    %195 = vmatpush2.msra.mxu0 0.0
    %196 = vmatprep.subr.mxu0 0.0
    %197 = vmatpush2.msra.mxu0 0.0
    %198 = vmatprep.subr.mxu0 0.0
    %199 = vmatpush2.msra.mxu0 0.0
    %200 = vmatprep.subr.mxu0 0.0
    %201 = vmatpush2.msra.mxu0 0.0
    %202 = vmatprep.subr.mxu0 0.0
    %203 = vmatpush2.msra.mxu0 0.0
    %204 = vmatprep.mubr.f32.mxu0 0.0
    %205 = vmatmul.mubr.f32.gmra.mxu0 %v117
    %v206 = vpop.f32.mrf.mxu0
    %v207 = vadd.f32 %v113, %v206
    %v208 = vpop.f32.mrf.mxu0
    %209 = vmatprep.mubr.f32.mxu0 0.0
    %210 = vmatmul.mubr.f32.gmra.mxu0 %v120
    %v211 = vpop.f32.mrf.mxu0
    %v212 = vadd.f32 %v113, %v211
    %v213 = vpop.f32.mrf.mxu0
    %214 = vmatprep.mubr.f32.mxu0 0.0
    %215 = vmatmul.mubr.f32.gmra.mxu0 %v123
    %v216 = vpop.f32.mrf.mxu0
    %v217 = vadd.f32 %v113, %v216
    %v218 = vpop.f32.mrf.mxu0
    %219 = vmatprep.mubr.f32.mxu0 0.0
    %220 = vmatmul.mubr.f32.gmra.mxu0 %v126
    %v221 = vpop.f32.mrf.mxu0
    %v222 = vadd.f32 %v113, %v221
    %v223 = vpop.f32.mrf.mxu0
    %224 = vmatprep.mubr.f32.mxu0 0.0
    %225 = vmatmul.mubr.f32.gmra.mxu0 %v129
    %v226 = vpop.f32.mrf.mxu0
    %v227 = vadd.f32 %v113, %v226
    %v228 = vpop.f32.mrf.mxu0
    %229 = vmatprep.mubr.f32.mxu0 0.0
    %230 = vmatmul.mubr.f32.gmra.mxu0 %v132
    %v231 = vpop.f32.mrf.mxu0
    %v232 = vadd.f32 %v113, %v231
    %v233 = vpop.f32.mrf.mxu0
    %234 = vmatprep.mubr.f32.mxu0 0.0
    %235 = vmatmul.mubr.f32.gmra.mxu0 %v135
    %v236 = vpop.f32.mrf.mxu0
    %v237 = vadd.f32 %v113, %v236
    %v238 = vpop.f32.mrf.mxu0
    %239 = vmatprep.mubr.f32.mxu0 0.0
    %240 = vmatmul.mubr.f32.gmra.mxu0 %v138
    %v241 = vpop.f32.mrf.mxu0
    %v242 = vadd.f32 %v113, %v241
    %v243 = vpop.f32.mrf.mxu0
    %244 = vdwg.mxu0
    %vm245 = vcmask 261120
    %v247 = vsel %vm245, 0.0, 0
    %249 = vmatprep.subr.mxu0 0.0
    %250 = vmatpush1.msra.mxu0 0.0
    %251 = vmatprep.subr.mxu0 0.0
    %252 = vmatpush1.msra.mxu0 0.0
    %253 = vmatprep.subr.mxu0 0.0
    %254 = vmatpush1.msra.mxu0 0.0
    %255 = vmatprep.subr.mxu0 0.0
    %256 = vmatpush1.msra.mxu0 0.0
    %257 = vmatprep.subr.mxu0 0.0
    %258 = vmatpush1.msra.mxu0 0.0
    %259 = vmatprep.subr.mxu0 0.0
    %260 = vmatpush1.msra.mxu0 0.0
    %261 = vmatprep.subr.mxu0 0.0
    %262 = vmatpush1.msra.mxu0 0.0
    %263 = vmatprep.subr.mxu0 0.0
    %264 = vmatpush1.msra.mxu0 0.0
    %265 = vmatprep.subr.mxu0 0.0
    %266 = vmatpush1.msra.mxu0 0.0
    %267 = vmatprep.subr.mxu0 0.0
    %268 = vmatpush1.msra.mxu0 0.0
    %269 = vmatprep.subr.mxu0 0.0
    %270 = vmatpush1.msra.mxu0 0.0
    %271 = vmatprep.subr.mxu0 0.0
    %272 = vmatpush1.msra.mxu0 0.0
    %273 = vmatprep.subr.mxu0 0.0
    %274 = vmatpush1.msra.mxu0 %v99
    %275 = vmatprep.subr.mxu0 0.0
    %276 = vmatpush1.msra.mxu0 %v98
    %277 = vmatprep.subr.mxu0 0.0
    %278 = vmatpush1.msra.mxu0 %v97
    %279 = vmatprep.subr.mxu0 0.0
    %280 = vmatpush1.msra.mxu0 %v96
    %281 = vmatprep.subr.mxu0 0.0
    %282 = vmatpush2.msra.mxu0 0.0
    %283 = vmatprep.subr.mxu0 0.0
    %284 = vmatpush2.msra.mxu0 0.0
    %285 = vmatprep.subr.mxu0 0.0
    %286 = vmatpush2.msra.mxu0 0.0
    %287 = vmatprep.subr.mxu0 0.0
    %288 = vmatpush2.msra.mxu0 0.0
    %289 = vmatprep.subr.mxu0 0.0
    %290 = vmatpush2.msra.mxu0 0.0
    %291 = vmatprep.subr.mxu0 0.0
    %292 = vmatpush2.msra.mxu0 0.0
    %293 = vmatprep.subr.mxu0 0.0
    %294 = vmatpush2.msra.mxu0 0.0
    %295 = vmatprep.subr.mxu0 0.0
    %296 = vmatpush2.msra.mxu0 0.0
    %297 = vmatprep.subr.mxu0 0.0
    %298 = vmatpush2.msra.mxu0 0.0
    %299 = vmatprep.subr.mxu0 0.0
    %300 = vmatpush2.msra.mxu0 0.0
    %301 = vmatprep.subr.mxu0 0.0
    %302 = vmatpush2.msra.mxu0 0.0
    %303 = vmatprep.subr.mxu0 0.0
    %304 = vmatpush2.msra.mxu0 0.0
    %305 = vmatprep.subr.mxu0 0.0
    %306 = vmatpush2.msra.mxu0 0.0
    %307 = vmatprep.subr.mxu0 0.0
    %308 = vmatpush2.msra.mxu0 0.0
    %309 = vmatprep.subr.mxu0 0.0
    %310 = vmatpush2.msra.mxu0 0.0
    %311 = vmatprep.subr.mxu0 0.0
    %312 = vmatpush2.msra.mxu0 0.0
    %313 = vmatprep.mubr.f32.mxu0 0.0
    %314 = vmatmul.mubr.f32.gmra.mxu0 %v247
    %v315 = vpop.f32.mrf.mxu0
    %v316 = vadd.f32 0.0, %v315
    %v317 = vpop.f32.mrf.mxu0
    %318 = vdwg.mxu0
    %v319 = vadd.f32 %v207, %v316
    %v320 = vxor.u32 %v319, 2147483648
    %v321 = vmul.f32 %v320, 1.442695
    %v322 = vpow.pop %v321
    %v323 = vadd.f32 %v322, 1.0
    %v324 = vrcp.pop %v323
    %v325 = vmul.f32 1.0, %v324
    %v326 = vtanh.pop %v319
    %v327 = vmul.f32 %v325, 0.0
    %329 = vrot.lane.b32.xlu0 %v326, 64
    %v330 = vpop.permute.xlu0 %329
    %v332 = vmul.f32 %v325, %v330
    %334 = vrot.lane.b32.xlu0 %v332, 32
    %v335 = vpop.permute.xlu0 %334
    %v337 = vadd.f32 %v327, %v335
    %v338 = vtanh.pop %v337
    %340 = vrot.lane.b32.xlu0 %v338, 64
    %v341 = vpop.permute.xlu0 %340
    %v343 = vmul.f32 %v325, %v341
    %345 = vrot.lane.b32.xlu0 %v343, 32
    %v346 = vpop.permute.xlu0 %345
    %v347 = vsel %vm245, %v346, 0
    %349 = vmatprep.subr.mxu0 0.0
    %350 = vmatpush1.msra.mxu0 0.0
    %351 = vmatprep.subr.mxu0 0.0
    %352 = vmatpush1.msra.mxu0 0.0
    %353 = vmatprep.subr.mxu0 0.0
    %354 = vmatpush1.msra.mxu0 0.0
    %355 = vmatprep.subr.mxu0 0.0
    %356 = vmatpush1.msra.mxu0 0.0
    %357 = vmatprep.subr.mxu0 0.0
    %358 = vmatpush1.msra.mxu0 0.0
    %359 = vmatprep.subr.mxu0 0.0
    %360 = vmatpush1.msra.mxu0 0.0
    %361 = vmatprep.subr.mxu0 0.0
    %362 = vmatpush1.msra.mxu0 0.0
    %363 = vmatprep.subr.mxu0 0.0
    %364 = vmatpush1.msra.mxu0 0.0
    %365 = vmatprep.subr.mxu0 0.0
    %366 = vmatpush1.msra.mxu0 0.0
    %367 = vmatprep.subr.mxu0 0.0
    %368 = vmatpush1.msra.mxu0 0.0
    %369 = vmatprep.subr.mxu0 0.0
    %370 = vmatpush1.msra.mxu0 0.0
    %371 = vmatprep.subr.mxu0 0.0
    %372 = vmatpush1.msra.mxu0 0.0
    %373 = vmatprep.subr.mxu0 0.0
    %374 = vmatpush1.msra.mxu0 %v99
    %375 = vmatprep.subr.mxu0 0.0
    %376 = vmatpush1.msra.mxu0 %v98
    %377 = vmatprep.subr.mxu0 0.0
    %378 = vmatpush1.msra.mxu0 %v97
    %379 = vmatprep.subr.mxu0 0.0
    %380 = vmatpush1.msra.mxu0 %v96
    %381 = vmatprep.subr.mxu0 0.0
    %382 = vmatpush2.msra.mxu0 0.0
    %383 = vmatprep.subr.mxu0 0.0
    %384 = vmatpush2.msra.mxu0 0.0
    %385 = vmatprep.subr.mxu0 0.0
    %386 = vmatpush2.msra.mxu0 0.0
    %387 = vmatprep.subr.mxu0 0.0
    %388 = vmatpush2.msra.mxu0 0.0
    %389 = vmatprep.subr.mxu0 0.0
    %390 = vmatpush2.msra.mxu0 0.0
    %391 = vmatprep.subr.mxu0 0.0
    %392 = vmatpush2.msra.mxu0 0.0
    %393 = vmatprep.subr.mxu0 0.0
    %394 = vmatpush2.msra.mxu0 0.0
    %395 = vmatprep.subr.mxu0 0.0
    %396 = vmatpush2.msra.mxu0 0.0
    %397 = vmatprep.subr.mxu0 0.0
    %398 = vmatpush2.msra.mxu0 0.0
    %399 = vmatprep.subr.mxu0 0.0
    %400 = vmatpush2.msra.mxu0 0.0
    %401 = vmatprep.subr.mxu0 0.0
    %402 = vmatpush2.msra.mxu0 0.0
    %403 = vmatprep.subr.mxu0 0.0
    %404 = vmatpush2.msra.mxu0 0.0
    %405 = vmatprep.subr.mxu0 0.0
    %406 = vmatpush2.msra.mxu0 0.0
    %407 = vmatprep.subr.mxu0 0.0
    %408 = vmatpush2.msra.mxu0 0.0
    %409 = vmatprep.subr.mxu0 0.0
    %410 = vmatpush2.msra.mxu0 0.0
    %411 = vmatprep.subr.mxu0 0.0
    %412 = vmatpush2.msra.mxu0 0.0
    %413 = vmatprep.mubr.f32.mxu0 0.0
    %414 = vmatmul.mubr.f32.gmra.mxu0 %v347
    %v415 = vpop.f32.mrf.mxu0
    %v416 = vadd.f32 0.0, %v415
    %v417 = vpop.f32.mrf.mxu0
    %418 = vdwg.mxu0
    %v419 = vadd.f32 %v212, %v416
    %v420 = vxor.u32 %v419, 2147483648
    %v421 = vmul.f32 %v420, 1.442695
    %v422 = vpow.pop %v421
    %v423 = vadd.f32 %v422, 1.0
    %v424 = vrcp.pop %v423
    %v425 = vmul.f32 1.0, %v424
    %v426 = vtanh.pop %v419
    %v427 = vmul.f32 %v425, %v337
    %429 = vrot.lane.b32.xlu0 %v426, 64
    %v430 = vpop.permute.xlu0 %429
    %v432 = vmul.f32 %v425, %v430
    %434 = vrot.lane.b32.xlu0 %v432, 32
    %v435 = vpop.permute.xlu0 %434
    %v437 = vadd.f32 %v427, %v435
    %v438 = vtanh.pop %v437
    %440 = vrot.lane.b32.xlu0 %v438, 64
    %v441 = vpop.permute.xlu0 %440
    %v443 = vmul.f32 %v425, %v441
    %445 = vrot.lane.b32.xlu0 %v443, 32
    %v446 = vpop.permute.xlu0 %445
    %v447 = vsel %vm245, %v446, 0
    %449 = vmatprep.subr.mxu0 0.0
    %450 = vmatpush1.msra.mxu0 0.0
    %451 = vmatprep.subr.mxu0 0.0
    %452 = vmatpush1.msra.mxu0 0.0
    %453 = vmatprep.subr.mxu0 0.0
    %454 = vmatpush1.msra.mxu0 0.0
    %455 = vmatprep.subr.mxu0 0.0
    %456 = vmatpush1.msra.mxu0 0.0
    %457 = vmatprep.subr.mxu0 0.0
    %458 = vmatpush1.msra.mxu0 0.0
    %459 = vmatprep.subr.mxu0 0.0
    %460 = vmatpush1.msra.mxu0 0.0
    %461 = vmatprep.subr.mxu0 0.0
    %462 = vmatpush1.msra.mxu0 0.0
    %463 = vmatprep.subr.mxu0 0.0
    %464 = vmatpush1.msra.mxu0 0.0
    %465 = vmatprep.subr.mxu0 0.0
    %466 = vmatpush1.msra.mxu0 0.0
    %467 = vmatprep.subr.mxu0 0.0
    %468 = vmatpush1.msra.mxu0 0.0
    %469 = vmatprep.subr.mxu0 0.0
    %470 = vmatpush1.msra.mxu0 0.0
    %471 = vmatprep.subr.mxu0 0.0
    %472 = vmatpush1.msra.mxu0 0.0
    %473 = vmatprep.subr.mxu0 0.0
    %474 = vmatpush1.msra.mxu0 %v99
    %475 = vmatprep.subr.mxu0 0.0
    %476 = vmatpush1.msra.mxu0 %v98
    %477 = vmatprep.subr.mxu0 0.0
    %478 = vmatpush1.msra.mxu0 %v97
    %479 = vmatprep.subr.mxu0 0.0
    %480 = vmatpush1.msra.mxu0 %v96
    %481 = vmatprep.subr.mxu0 0.0
    %482 = vmatpush2.msra.mxu0 0.0
    %483 = vmatprep.subr.mxu0 0.0
    %484 = vmatpush2.msra.mxu0 0.0
    %485 = vmatprep.subr.mxu0 0.0
    %486 = vmatpush2.msra.mxu0 0.0
    %487 = vmatprep.subr.mxu0 0.0
    %488 = vmatpush2.msra.mxu0 0.0
    %489 = vmatprep.subr.mxu0 0.0
    %490 = vmatpush2.msra.mxu0 0.0
    %491 = vmatprep.subr.mxu0 0.0
    %492 = vmatpush2.msra.mxu0 0.0
    %493 = vmatprep.subr.mxu0 0.0
    %494 = vmatpush2.msra.mxu0 0.0
    %495 = vmatprep.subr.mxu0 0.0
    %496 = vmatpush2.msra.mxu0 0.0
    %497 = vmatprep.subr.mxu0 0.0
    %498 = vmatpush2.msra.mxu0 0.0
    %499 = vmatprep.subr.mxu0 0.0
    %500 = vmatpush2.msra.mxu0 0.0
    %501 = vmatprep.subr.mxu0 0.0
    %502 = vmatpush2.msra.mxu0 0.0
    %503 = vmatprep.subr.mxu0 0.0
    %504 = vmatpush2.msra.mxu0 0.0
    %505 = vmatprep.subr.mxu0 0.0
    %506 = vmatpush2.msra.mxu0 0.0
    %507 = vmatprep.subr.mxu0 0.0
    %508 = vmatpush2.msra.mxu0 0.0
    %509 = vmatprep.subr.mxu0 0.0
    %510 = vmatpush2.msra.mxu0 0.0
    %511 = vmatprep.subr.mxu0 0.0
    %512 = vmatpush2.msra.mxu0 0.0
    %513 = vmatprep.mubr.f32.mxu0 0.0
    %514 = vmatmul.mubr.f32.gmra.mxu0 %v447
    %v515 = vpop.f32.mrf.mxu0
    %v516 = vadd.f32 0.0, %v515
    %v517 = vpop.f32.mrf.mxu0
    %518 = vdwg.mxu0
    %v519 = vadd.f32 %v217, %v516
    %v520 = vxor.u32 %v519, 2147483648
    %v521 = vmul.f32 %v520, 1.442695
    %v522 = vpow.pop %v521
    %v523 = vadd.f32 %v522, 1.0
    %v524 = vrcp.pop %v523
    %v525 = vmul.f32 1.0, %v524
    %v526 = vtanh.pop %v519
    %v527 = vmul.f32 %v525, %v437
    %529 = vrot.lane.b32.xlu0 %v526, 64
    %v530 = vpop.permute.xlu0 %529
    %v532 = vmul.f32 %v525, %v530
    %534 = vrot.lane.b32.xlu0 %v532, 32
    %v535 = vpop.permute.xlu0 %534
    %v537 = vadd.f32 %v527, %v535
    %v538 = vtanh.pop %v537
    %540 = vrot.lane.b32.xlu0 %v538, 64
    %v541 = vpop.permute.xlu0 %540
    %v543 = vmul.f32 %v525, %v541
    %545 = vrot.lane.b32.xlu0 %v543, 32
    %v546 = vpop.permute.xlu0 %545
    %v547 = vsel %vm245, %v546, 0
    %549 = vmatprep.subr.mxu0 0.0
    %550 = vmatpush1.msra.mxu0 0.0
    %551 = vmatprep.subr.mxu0 0.0
    %552 = vmatpush1.msra.mxu0 0.0
    %553 = vmatprep.subr.mxu0 0.0
    %554 = vmatpush1.msra.mxu0 0.0
    %555 = vmatprep.subr.mxu0 0.0
    %556 = vmatpush1.msra.mxu0 0.0
    %557 = vmatprep.subr.mxu0 0.0
    %558 = vmatpush1.msra.mxu0 0.0
    %559 = vmatprep.subr.mxu0 0.0
    %560 = vmatpush1.msra.mxu0 0.0
    %561 = vmatprep.subr.mxu0 0.0
    %562 = vmatpush1.msra.mxu0 0.0
    %563 = vmatprep.subr.mxu0 0.0
    %564 = vmatpush1.msra.mxu0 0.0
    %565 = vmatprep.subr.mxu0 0.0
    %566 = vmatpush1.msra.mxu0 0.0
    %567 = vmatprep.subr.mxu0 0.0
    %568 = vmatpush1.msra.mxu0 0.0
    %569 = vmatprep.subr.mxu0 0.0
    %570 = vmatpush1.msra.mxu0 0.0
    %571 = vmatprep.subr.mxu0 0.0
    %572 = vmatpush1.msra.mxu0 0.0
    %573 = vmatprep.subr.mxu0 0.0
    %574 = vmatpush1.msra.mxu0 %v99
    %575 = vmatprep.subr.mxu0 0.0
    %576 = vmatpush1.msra.mxu0 %v98
    %577 = vmatprep.subr.mxu0 0.0
    %578 = vmatpush1.msra.mxu0 %v97
    %579 = vmatprep.subr.mxu0 0.0
    %580 = vmatpush1.msra.mxu0 %v96
    %581 = vmatprep.subr.mxu0 0.0
    %582 = vmatpush2.msra.mxu0 0.0
    %583 = vmatprep.subr.mxu0 0.0
    %584 = vmatpush2.msra.mxu0 0.0
    %585 = vmatprep.subr.mxu0 0.0
    %586 = vmatpush2.msra.mxu0 0.0
    %587 = vmatprep.subr.mxu0 0.0
    %588 = vmatpush2.msra.mxu0 0.0
    %589 = vmatprep.subr.mxu0 0.0
    %590 = vmatpush2.msra.mxu0 0.0
    %591 = vmatprep.subr.mxu0 0.0
    %592 = vmatpush2.msra.mxu0 0.0
    %593 = vmatprep.subr.mxu0 0.0
    %594 = vmatpush2.msra.mxu0 0.0
    %595 = vmatprep.subr.mxu0 0.0
    %596 = vmatpush2.msra.mxu0 0.0
    %597 = vmatprep.subr.mxu0 0.0
    %598 = vmatpush2.msra.mxu0 0.0
    %599 = vmatprep.subr.mxu0 0.0
    %600 = vmatpush2.msra.mxu0 0.0
    %601 = vmatprep.subr.mxu0 0.0
    %602 = vmatpush2.msra.mxu0 0.0
    %603 = vmatprep.subr.mxu0 0.0
    %604 = vmatpush2.msra.mxu0 0.0
    %605 = vmatprep.subr.mxu0 0.0
    %606 = vmatpush2.msra.mxu0 0.0
    %607 = vmatprep.subr.mxu0 0.0
    %608 = vmatpush2.msra.mxu0 0.0
    %609 = vmatprep.subr.mxu0 0.0
    %610 = vmatpush2.msra.mxu0 0.0
    %611 = vmatprep.subr.mxu0 0.0
    %612 = vmatpush2.msra.mxu0 0.0
    %613 = vmatprep.mubr.f32.mxu0 0.0
    %614 = vmatmul.mubr.f32.gmra.mxu0 %v547
    %v615 = vpop.f32.mrf.mxu0
    %v616 = vadd.f32 0.0, %v615
    %v617 = vpop.f32.mrf.mxu0
    %618 = vdwg.mxu0
    %v619 = vadd.f32 %v222, %v616
    %v620 = vxor.u32 %v619, 2147483648
    %v621 = vmul.f32 %v620, 1.442695
    %v622 = vpow.pop %v621
    %v623 = vadd.f32 %v622, 1.0
    %v624 = vrcp.pop %v623
    %v625 = vmul.f32 1.0, %v624
    %v626 = vtanh.pop %v619
    %v627 = vmul.f32 %v625, %v537
    %629 = vrot.lane.b32.xlu0 %v626, 64
    %v630 = vpop.permute.xlu0 %629
    %v632 = vmul.f32 %v625, %v630
    %634 = vrot.lane.b32.xlu0 %v632, 32
    %v635 = vpop.permute.xlu0 %634
    %v637 = vadd.f32 %v627, %v635
    %v638 = vtanh.pop %v637
    %640 = vrot.lane.b32.xlu0 %v638, 64
    %v641 = vpop.permute.xlu0 %640
    %v643 = vmul.f32 %v625, %v641
    %645 = vrot.lane.b32.xlu0 %v643, 32
    %v646 = vpop.permute.xlu0 %645
    %v647 = vsel %vm245, %v646, 0
    %649 = vmatprep.subr.mxu0 0.0
    %650 = vmatpush1.msra.mxu0 0.0
    %651 = vmatprep.subr.mxu0 0.0
    %652 = vmatpush1.msra.mxu0 0.0
    %653 = vmatprep.subr.mxu0 0.0
    %654 = vmatpush1.msra.mxu0 0.0
    %655 = vmatprep.subr.mxu0 0.0
    %656 = vmatpush1.msra.mxu0 0.0
    %657 = vmatprep.subr.mxu0 0.0
    %658 = vmatpush1.msra.mxu0 0.0
    %659 = vmatprep.subr.mxu0 0.0
    %660 = vmatpush1.msra.mxu0 0.0
    %661 = vmatprep.subr.mxu0 0.0
    %662 = vmatpush1.msra.mxu0 0.0
    %663 = vmatprep.subr.mxu0 0.0
    %664 = vmatpush1.msra.mxu0 0.0
    %665 = vmatprep.subr.mxu0 0.0
    %666 = vmatpush1.msra.mxu0 0.0
    %667 = vmatprep.subr.mxu0 0.0
    %668 = vmatpush1.msra.mxu0 0.0
    %669 = vmatprep.subr.mxu0 0.0
    %670 = vmatpush1.msra.mxu0 0.0
    %671 = vmatprep.subr.mxu0 0.0
    %672 = vmatpush1.msra.mxu0 0.0
    %673 = vmatprep.subr.mxu0 0.0
    %674 = vmatpush1.msra.mxu0 %v99
    %675 = vmatprep.subr.mxu0 0.0
    %676 = vmatpush1.msra.mxu0 %v98
    %677 = vmatprep.subr.mxu0 0.0
    %678 = vmatpush1.msra.mxu0 %v97
    %679 = vmatprep.subr.mxu0 0.0
    %680 = vmatpush1.msra.mxu0 %v96
    %681 = vmatprep.subr.mxu0 0.0
    %682 = vmatpush2.msra.mxu0 0.0
    %683 = vmatprep.subr.mxu0 0.0
    %684 = vmatpush2.msra.mxu0 0.0
    %685 = vmatprep.subr.mxu0 0.0
    %686 = vmatpush2.msra.mxu0 0.0
    %687 = vmatprep.subr.mxu0 0.0
    %688 = vmatpush2.msra.mxu0 0.0
    %689 = vmatprep.subr.mxu0 0.0
    %690 = vmatpush2.msra.mxu0 0.0
    %691 = vmatprep.subr.mxu0 0.0
    %692 = vmatpush2.msra.mxu0 0.0
    %693 = vmatprep.subr.mxu0 0.0
    %694 = vmatpush2.msra.mxu0 0.0
    %695 = vmatprep.subr.mxu0 0.0
    %696 = vmatpush2.msra.mxu0 0.0
    %697 = vmatprep.subr.mxu0 0.0
    %698 = vmatpush2.msra.mxu0 0.0
    %699 = vmatprep.subr.mxu0 0.0
    %700 = vmatpush2.msra.mxu0 0.0
    %701 = vmatprep.subr.mxu0 0.0
    %702 = vmatpush2.msra.mxu0 0.0
    %703 = vmatprep.subr.mxu0 0.0
    %704 = vmatpush2.msra.mxu0 0.0
    %705 = vmatprep.subr.mxu0 0.0
    %706 = vmatpush2.msra.mxu0 0.0
    %707 = vmatprep.subr.mxu0 0.0
    %708 = vmatpush2.msra.mxu0 0.0
    %709 = vmatprep.subr.mxu0 0.0
    %710 = vmatpush2.msra.mxu0 0.0
    %711 = vmatprep.subr.mxu0 0.0
    %712 = vmatpush2.msra.mxu0 0.0
    %713 = vmatprep.mubr.f32.mxu0 0.0
    %714 = vmatmul.mubr.f32.gmra.mxu0 %v647
    %v715 = vpop.f32.mrf.mxu0
    %v716 = vadd.f32 0.0, %v715
    %v717 = vpop.f32.mrf.mxu0
    %718 = vdwg.mxu0
    %v719 = vadd.f32 %v227, %v716
    %v720 = vxor.u32 %v719, 2147483648
    %v721 = vmul.f32 %v720, 1.442695
    %v722 = vpow.pop %v721
    %v723 = vadd.f32 %v722, 1.0
    %v724 = vrcp.pop %v723
    %v725 = vmul.f32 1.0, %v724
    %v726 = vtanh.pop %v719
    %v727 = vmul.f32 %v725, %v637
    %729 = vrot.lane.b32.xlu0 %v726, 64
    %v730 = vpop.permute.xlu0 %729
    %v732 = vmul.f32 %v725, %v730
    %734 = vrot.lane.b32.xlu0 %v732, 32
    %v735 = vpop.permute.xlu0 %734
    %v737 = vadd.f32 %v727, %v735
    %v738 = vtanh.pop %v737
    %740 = vrot.lane.b32.xlu0 %v738, 64
    %v741 = vpop.permute.xlu0 %740
    %v743 = vmul.f32 %v725, %v741
    %745 = vrot.lane.b32.xlu0 %v743, 32
    %v746 = vpop.permute.xlu0 %745
    %v747 = vsel %vm245, %v746, 0
    %749 = vmatprep.subr.mxu0 0.0
    %750 = vmatpush1.msra.mxu0 0.0
    %751 = vmatprep.subr.mxu0 0.0
    %752 = vmatpush1.msra.mxu0 0.0
    %753 = vmatprep.subr.mxu0 0.0
    %754 = vmatpush1.msra.mxu0 0.0
    %755 = vmatprep.subr.mxu0 0.0
    %756 = vmatpush1.msra.mxu0 0.0
    %757 = vmatprep.subr.mxu0 0.0
    %758 = vmatpush1.msra.mxu0 0.0
    %759 = vmatprep.subr.mxu0 0.0
    %760 = vmatpush1.msra.mxu0 0.0
    %761 = vmatprep.subr.mxu0 0.0
    %762 = vmatpush1.msra.mxu0 0.0
    %763 = vmatprep.subr.mxu0 0.0
    %764 = vmatpush1.msra.mxu0 0.0
    %765 = vmatprep.subr.mxu0 0.0
    %766 = vmatpush1.msra.mxu0 0.0
    %767 = vmatprep.subr.mxu0 0.0
    %768 = vmatpush1.msra.mxu0 0.0
    %769 = vmatprep.subr.mxu0 0.0
    %770 = vmatpush1.msra.mxu0 0.0
    %771 = vmatprep.subr.mxu0 0.0
    %772 = vmatpush1.msra.mxu0 0.0
    %773 = vmatprep.subr.mxu0 0.0
    %774 = vmatpush1.msra.mxu0 %v99
    %775 = vmatprep.subr.mxu0 0.0
    %776 = vmatpush1.msra.mxu0 %v98
    %777 = vmatprep.subr.mxu0 0.0
    %778 = vmatpush1.msra.mxu0 %v97
    %779 = vmatprep.subr.mxu0 0.0
    %780 = vmatpush1.msra.mxu0 %v96
    %781 = vmatprep.subr.mxu0 0.0
    %782 = vmatpush2.msra.mxu0 0.0
    %783 = vmatprep.subr.mxu0 0.0
    %784 = vmatpush2.msra.mxu0 0.0
    %785 = vmatprep.subr.mxu0 0.0
    %786 = vmatpush2.msra.mxu0 0.0
    %787 = vmatprep.subr.mxu0 0.0
    %788 = vmatpush2.msra.mxu0 0.0
    %789 = vmatprep.subr.mxu0 0.0
    %790 = vmatpush2.msra.mxu0 0.0
    %791 = vmatprep.subr.mxu0 0.0
    %792 = vmatpush2.msra.mxu0 0.0
    %793 = vmatprep.subr.mxu0 0.0
    %794 = vmatpush2.msra.mxu0 0.0
    %795 = vmatprep.subr.mxu0 0.0
    %796 = vmatpush2.msra.mxu0 0.0
    %797 = vmatprep.subr.mxu0 0.0
    %798 = vmatpush2.msra.mxu0 0.0
    %799 = vmatprep.subr.mxu0 0.0
    %800 = vmatpush2.msra.mxu0 0.0
    %801 = vmatprep.subr.mxu0 0.0
    %802 = vmatpush2.msra.mxu0 0.0
    %803 = vmatprep.subr.mxu0 0.0
    %804 = vmatpush2.msra.mxu0 0.0
    %805 = vmatprep.subr.mxu0 0.0
    %806 = vmatpush2.msra.mxu0 0.0
    %807 = vmatprep.subr.mxu0 0.0
    %808 = vmatpush2.msra.mxu0 0.0
    %809 = vmatprep.subr.mxu0 0.0
    %810 = vmatpush2.msra.mxu0 0.0
    %811 = vmatprep.subr.mxu0 0.0
    %812 = vmatpush2.msra.mxu0 0.0
    %813 = vmatprep.mubr.f32.mxu0 0.0
    %814 = vmatmul.mubr.f32.gmra.mxu0 %v747
    %v815 = vpop.f32.mrf.mxu0
    %v816 = vadd.f32 0.0, %v815
    %v817 = vpop.f32.mrf.mxu0
    %818 = vdwg.mxu0
    %v819 = vadd.f32 %v232, %v816
    %v820 = vxor.u32 %v819, 2147483648
    %v821 = vmul.f32 %v820, 1.442695
    %v822 = vpow.pop %v821
    %v823 = vadd.f32 %v822, 1.0
    %v824 = vrcp.pop %v823
    %v825 = vmul.f32 1.0, %v824
    %v826 = vtanh.pop %v819
    %v827 = vmul.f32 %v825, %v737
    %829 = vrot.lane.b32.xlu0 %v826, 64
    %v830 = vpop.permute.xlu0 %829
    %v832 = vmul.f32 %v825, %v830
    %834 = vrot.lane.b32.xlu0 %v832, 32
    %v835 = vpop.permute.xlu0 %834
    %v837 = vadd.f32 %v827, %v835
    %v838 = vtanh.pop %v837
    %840 = vrot.lane.b32.xlu0 %v838, 64
    %v841 = vpop.permute.xlu0 %840
    %v843 = vmul.f32 %v825, %v841
    %845 = vrot.lane.b32.xlu0 %v843, 32
    %v846 = vpop.permute.xlu0 %845
    %v847 = vsel %vm245, %v846, 0
    %849 = vmatprep.subr.mxu0 0.0
    %850 = vmatpush1.msra.mxu0 0.0
    %851 = vmatprep.subr.mxu0 0.0
    %852 = vmatpush1.msra.mxu0 0.0
    %853 = vmatprep.subr.mxu0 0.0
    %854 = vmatpush1.msra.mxu0 0.0
    %855 = vmatprep.subr.mxu0 0.0
    %856 = vmatpush1.msra.mxu0 0.0
    %857 = vmatprep.subr.mxu0 0.0
    %858 = vmatpush1.msra.mxu0 0.0
    %859 = vmatprep.subr.mxu0 0.0
    %860 = vmatpush1.msra.mxu0 0.0
    %861 = vmatprep.subr.mxu0 0.0
    %862 = vmatpush1.msra.mxu0 0.0
    %863 = vmatprep.subr.mxu0 0.0
    %864 = vmatpush1.msra.mxu0 0.0
    %865 = vmatprep.subr.mxu0 0.0
    %866 = vmatpush1.msra.mxu0 0.0
    %867 = vmatprep.subr.mxu0 0.0
    %868 = vmatpush1.msra.mxu0 0.0
    %869 = vmatprep.subr.mxu0 0.0
    %870 = vmatpush1.msra.mxu0 0.0
    %871 = vmatprep.subr.mxu0 0.0
    %872 = vmatpush1.msra.mxu0 0.0
    %873 = vmatprep.subr.mxu0 0.0
    %874 = vmatpush1.msra.mxu0 %v99
    %875 = vmatprep.subr.mxu0 0.0
    %876 = vmatpush1.msra.mxu0 %v98
    %877 = vmatprep.subr.mxu0 0.0
    %878 = vmatpush1.msra.mxu0 %v97
    %879 = vmatprep.subr.mxu0 0.0
    %880 = vmatpush1.msra.mxu0 %v96
    %881 = vmatprep.subr.mxu0 0.0
    %882 = vmatpush2.msra.mxu0 0.0
    %883 = vmatprep.subr.mxu0 0.0
    %884 = vmatpush2.msra.mxu0 0.0
    %885 = vmatprep.subr.mxu0 0.0
    %886 = vmatpush2.msra.mxu0 0.0
    %887 = vmatprep.subr.mxu0 0.0
    %888 = vmatpush2.msra.mxu0 0.0
    %889 = vmatprep.subr.mxu0 0.0
    %890 = vmatpush2.msra.mxu0 0.0
    %891 = vmatprep.subr.mxu0 0.0
    %892 = vmatpush2.msra.mxu0 0.0
    %893 = vmatprep.subr.mxu0 0.0
    %894 = vmatpush2.msra.mxu0 0.0
    %895 = vmatprep.subr.mxu0 0.0
    %896 = vmatpush2.msra.mxu0 0.0
    %897 = vmatprep.subr.mxu0 0.0
    %898 = vmatpush2.msra.mxu0 0.0
    %899 = vmatprep.subr.mxu0 0.0
    %900 = vmatpush2.msra.mxu0 0.0
    %901 = vmatprep.subr.mxu0 0.0
    %902 = vmatpush2.msra.mxu0 0.0
    %903 = vmatprep.subr.mxu0 0.0
    %904 = vmatpush2.msra.mxu0 0.0
    %905 = vmatprep.subr.mxu0 0.0
    %906 = vmatpush2.msra.mxu0 0.0
    %907 = vmatprep.subr.mxu0 0.0
    %908 = vmatpush2.msra.mxu0 0.0
    %909 = vmatprep.subr.mxu0 0.0
    %910 = vmatpush2.msra.mxu0 0.0
    %911 = vmatprep.subr.mxu0 0.0
    %912 = vmatpush2.msra.mxu0 0.0
    %913 = vmatprep.mubr.f32.mxu0 0.0
    %914 = vmatmul.mubr.f32.gmra.mxu0 %v847
    %v915 = vpop.f32.mrf.mxu0
    %v916 = vadd.f32 0.0, %v915
    %v917 = vpop.f32.mrf.mxu0
    %918 = vdwg.mxu0
    %v919 = vadd.f32 %v237, %v916
    %v920 = vxor.u32 %v919, 2147483648
    %v921 = vmul.f32 %v920, 1.442695
    %v922 = vpow.pop %v921
    %v923 = vadd.f32 %v922, 1.0
    %v924 = vrcp.pop %v923
    %v925 = vmul.f32 1.0, %v924
    %v926 = vtanh.pop %v919
    %v927 = vmul.f32 %v925, %v837
    %929 = vrot.lane.b32.xlu0 %v926, 64
    %v930 = vpop.permute.xlu0 %929
    %v932 = vmul.f32 %v925, %v930
    %934 = vrot.lane.b32.xlu0 %v932, 32
    %v935 = vpop.permute.xlu0 %934
    %v937 = vadd.f32 %v927, %v935
    %v938 = vtanh.pop %v937
    %940 = vrot.lane.b32.xlu0 %v938, 64
    %v941 = vpop.permute.xlu0 %940
    %v943 = vmul.f32 %v925, %v941
    %945 = vrot.lane.b32.xlu0 %v943, 32
    %v946 = vpop.permute.xlu0 %945
    %v947 = vsel %vm245, %v946, 0
    %949 = vmatprep.subr.mxu0 0.0
    %950 = vmatpush1.msra.mxu0 0.0
    %951 = vmatprep.subr.mxu0 0.0
    %952 = vmatpush1.msra.mxu0 0.0
    %953 = vmatprep.subr.mxu0 0.0
    %954 = vmatpush1.msra.mxu0 0.0
    %955 = vmatprep.subr.mxu0 0.0
    %956 = vmatpush1.msra.mxu0 0.0
    %957 = vmatprep.subr.mxu0 0.0
    %958 = vmatpush1.msra.mxu0 0.0
    %959 = vmatprep.subr.mxu0 0.0
    %960 = vmatpush1.msra.mxu0 0.0
    %961 = vmatprep.subr.mxu0 0.0
    %962 = vmatpush1.msra.mxu0 0.0
    %963 = vmatprep.subr.mxu0 0.0
    %964 = vmatpush1.msra.mxu0 0.0
    %965 = vmatprep.subr.mxu0 0.0
    %966 = vmatpush1.msra.mxu0 0.0
    %967 = vmatprep.subr.mxu0 0.0
    %968 = vmatpush1.msra.mxu0 0.0
    %969 = vmatprep.subr.mxu0 0.0
    %970 = vmatpush1.msra.mxu0 0.0
    %971 = vmatprep.subr.mxu0 0.0
    %972 = vmatpush1.msra.mxu0 0.0
    %973 = vmatprep.subr.mxu0 0.0
    %974 = vmatpush1.msra.mxu0 %v99
    %975 = vmatprep.subr.mxu0 0.0
    %976 = vmatpush1.msra.mxu0 %v98
    %977 = vmatprep.subr.mxu0 0.0
    %978 = vmatpush1.msra.mxu0 %v97
    %979 = vmatprep.subr.mxu0 0.0
    %980 = vmatpush1.msra.mxu0 %v96
    %981 = vmatprep.subr.mxu0 0.0
    %982 = vmatpush2.msra.mxu0 0.0
    %983 = vmatprep.subr.mxu0 0.0
    %984 = vmatpush2.msra.mxu0 0.0
    %985 = vmatprep.subr.mxu0 0.0
    %986 = vmatpush2.msra.mxu0 0.0
    %987 = vmatprep.subr.mxu0 0.0
    %988 = vmatpush2.msra.mxu0 0.0
    %989 = vmatprep.subr.mxu0 0.0
    %990 = vmatpush2.msra.mxu0 0.0
    %991 = vmatprep.subr.mxu0 0.0
    %992 = vmatpush2.msra.mxu0 0.0
    %993 = vmatprep.subr.mxu0 0.0
    %994 = vmatpush2.msra.mxu0 0.0
    %995 = vmatprep.subr.mxu0 0.0
    %996 = vmatpush2.msra.mxu0 0.0
    %997 = vmatprep.subr.mxu0 0.0
    %998 = vmatpush2.msra.mxu0 0.0
    %999 = vmatprep.subr.mxu0 0.0
    %1000 = vmatpush2.msra.mxu0 0.0
    %1001 = vmatprep.subr.mxu0 0.0
    %1002 = vmatpush2.msra.mxu0 0.0
    %1003 = vmatprep.subr.mxu0 0.0
    %1004 = vmatpush2.msra.mxu0 0.0
    %1005 = vmatprep.subr.mxu0 0.0
    %1006 = vmatpush2.msra.mxu0 0.0
    %1007 = vmatprep.subr.mxu0 0.0
    %1008 = vmatpush2.msra.mxu0 0.0
    %1009 = vmatprep.subr.mxu0 0.0
    %1010 = vmatpush2.msra.mxu0 0.0
    %1011 = vmatprep.subr.mxu0 0.0
    %1012 = vmatpush2.msra.mxu0 0.0
    %1013 = vmatprep.mubr.f32.mxu0 0.0
    %1014 = vmatmul.mubr.f32.gmra.mxu0 %v947
    %v1015 = vpop.f32.mrf.mxu0
    %v1016 = vadd.f32 0.0, %v1015
    %v1017 = vpop.f32.mrf.mxu0
    %1018 = vdwg.mxu0
    %v1019 = vadd.f32 %v242, %v1016
    %v1020 = vxor.u32 %v1019, 2147483648
    %v1021 = vmul.f32 %v1020, 1.442695
    %v1022 = vpow.pop %v1021
    %v1023 = vadd.f32 %v1022, 1.0
    %v1024 = vrcp.pop %v1023
    %v1025 = vmul.f32 1.0, %v1024
    %v1026 = vtanh.pop %v1019
    %v1027 = vmul.f32 %v1025, %v937
    %1029 = vrot.lane.b32.xlu0 %v1026, 64
    %v1030 = vpop.permute.xlu0 %1029
    %v1032 = vmul.f32 %v1025, %v1030
    %1034 = vrot.lane.b32.xlu0 %v1032, 32
    %v1035 = vpop.permute.xlu0 %1034
    %v1037 = vadd.f32 %v1027, %v1035
    %v1038 = vtanh.pop %v1037
    %1040 = vrot.lane.b32.xlu0 %v1038, 64
    %v1041 = vpop.permute.xlu0 %1040
    %v1043 = vmul.f32 %v1025, %v1041
    %v1044 = vld [vmem:[#allocation4] sm:$0xff]
    %v1045 = vld [vmem:[#allocation4 + $0x8] sm:$0xff]
    %v1046 = vld [vmem:[#allocation4 + $0x10] sm:$0xff]
    %v1047 = vld [vmem:[#allocation4 + $0x18] sm:$0xff]
    %v1048 = vld [vmem:[%s7] sm:$0x1]
    %v1050 = vlaneseq
    %v1051 = vshrl.u32 %v1050, 7
    %v1052 = vsub.s32 0, %v1051
    %v1053 = vrot.slane %v1048, %v1052
    %1056 = vrot.lane.b32.xlu0 %v1043, 32
    %v1057 = vpop.permute.xlu0 %1056
    %v1058 = vsel %vm245, %v1057, 0
    %1060 = vmatprep.subr.mxu0 0.0
    %1061 = vmatpush1.msra.mxu0 0.0
    %1062 = vmatprep.subr.mxu0 0.0
    %1063 = vmatpush1.msra.mxu0 0.0
    %1064 = vmatprep.subr.mxu0 0.0
    %1065 = vmatpush1.msra.mxu0 0.0
    %1066 = vmatprep.subr.mxu0 0.0
    %1067 = vmatpush1.msra.mxu0 0.0
    %1068 = vmatprep.subr.mxu0 0.0
    %1069 = vmatpush1.msra.mxu0 0.0
    %1070 = vmatprep.subr.mxu0 0.0
    %1071 = vmatpush1.msra.mxu0 0.0
    %1072 = vmatprep.subr.mxu0 0.0
    %1073 = vmatpush1.msra.mxu0 0.0
    %1074 = vmatprep.subr.mxu0 0.0
    %1075 = vmatpush1.msra.mxu0 0.0
    %1076 = vmatprep.subr.mxu0 0.0
    %1077 = vmatpush1.msra.mxu0 0.0
    %1078 = vmatprep.subr.mxu0 0.0
    %1079 = vmatpush1.msra.mxu0 0.0
    %1080 = vmatprep.subr.mxu0 0.0
    %1081 = vmatpush1.msra.mxu0 0.0
    %1082 = vmatprep.subr.mxu0 0.0
    %1083 = vmatpush1.msra.mxu0 0.0
    %1084 = vmatprep.subr.mxu0 0.0
    %1085 = vmatpush1.msra.mxu0 %v1047
    %1086 = vmatprep.subr.mxu0 0.0
    %1087 = vmatpush1.msra.mxu0 %v1046
    %1088 = vmatprep.subr.mxu0 0.0
    %1089 = vmatpush1.msra.mxu0 %v1045
    %1090 = vmatprep.subr.mxu0 0.0
    %1091 = vmatpush1.msra.mxu0 %v1044
    %1092 = vmatprep.subr.mxu0 0.0
    %1093 = vmatpush2.msra.mxu0 0.0
    %1094 = vmatprep.subr.mxu0 0.0
    %1095 = vmatpush2.msra.mxu0 0.0
    %1096 = vmatprep.subr.mxu0 0.0
    %1097 = vmatpush2.msra.mxu0 0.0
    %1098 = vmatprep.subr.mxu0 0.0
    %1099 = vmatpush2.msra.mxu0 0.0
    %1100 = vmatprep.subr.mxu0 0.0
    %1101 = vmatpush2.msra.mxu0 0.0
    %1102 = vmatprep.subr.mxu0 0.0
    %1103 = vmatpush2.msra.mxu0 0.0
    %1104 = vmatprep.subr.mxu0 0.0
    %1105 = vmatpush2.msra.mxu0 0.0
    %1106 = vmatprep.subr.mxu0 0.0
    %1107 = vmatpush2.msra.mxu0 0.0
    %1108 = vmatprep.subr.mxu0 0.0
    %1109 = vmatpush2.msra.mxu0 0.0
    %1110 = vmatprep.subr.mxu0 0.0
    %1111 = vmatpush2.msra.mxu0 0.0
    %1112 = vmatprep.subr.mxu0 0.0
    %1113 = vmatpush2.msra.mxu0 0.0
    %1114 = vmatprep.subr.mxu0 0.0
    %1115 = vmatpush2.msra.mxu0 0.0
    %1116 = vmatprep.subr.mxu0 0.0
    %1117 = vmatpush2.msra.mxu0 0.0
    %1118 = vmatprep.subr.mxu0 0.0
    %1119 = vmatpush2.msra.mxu0 0.0
    %1120 = vmatprep.subr.mxu0 0.0
    %1121 = vmatpush2.msra.mxu0 0.0
    %1122 = vmatprep.subr.mxu0 0.0
    %1123 = vmatpush2.msra.mxu0 0.0
    %1124 = vmatprep.mubr.f32.mxu0 0.0
    %1125 = vmatmul.mubr.f32.gmra.mxu0 %v1058
    %v1126 = vpop.f32.mrf.mxu0
    %v1127 = vadd.f32 %v1053, %v1126
    %v1128 = vpop.f32.mrf.mxu0
    %1129 = vdwg.mxu0
    %v1130 = vld [vmem:[%s5] sm:$0x3]
    %1132 = vset.pattern.permute.xlu0 0
    %1133 = vperm.xlu0 %1132, %v94
    %v1134 = vpop.permute.xlu0 %1133
    %v1136 = vlaneseq
    %v1137 = vshrl.u32 %v1136, 7
    %v1138 = vsub.s32 0, %v1137
    %v1139 = vrot.slane %v1130, %v1138
    %v1140 = vmul.f32 %v1134, %v1139
    %v1141 = vadd.f32 %v1127, %v1140
    %1142 = vset.pattern.permute.xlu0 1
    %1143 = vperm.xlu0 %1142, %v94
    %v1144 = vpop.permute.xlu0 %1143
    %v1146 = vlaneseq
    %v1147 = vshrl.u32 %v1146, 7
    %v1148 = vsub.s32 1, %v1147
    %v1149 = vrot.slane %v1130, %v1148
    %v1150 = vmul.f32 %v1144, %v1149
    %v1151 = vadd.f32 %v1141, %v1150
    %v1152 = vld [vmem:[%s8] sm:$0x1]
    %v1153 = vld [vmem:[%s9] sm:$0x1]
    %v1154 = vsel %vm245, %v1151, 0.0
    %1155 = vadd.xlane.f32.xlu0 %v1154
    %v1156 = vpop.xlane.xlu0 %1155
    %v1157 = vrcp.pop 32.0
    %v1158 = vmul.f32 %v1156, %v1157
    %v1159 = vsub.f32 %v1151, %v1158
    %v1160 = vmul.f32 %v1159, %v1159
    %v1161 = vsel %vm245, %v1160, 0.0
    %1162 = vadd.xlane.f32.xlu0 %v1161
    %v1163 = vpop.xlane.xlu0 %1162
    %v1164 = vmul.f32 %v1163, %v1157
    %v1165 = vadd.f32 %v1164, 1e-05
    %v1166 = vrsqrt.pop %v1165
    %v1167 = vmul.f32 %v1159, %v1166
    %v1169 = vlaneseq
    %v1170 = vshrl.u32 %v1169, 7
    %v1171 = vsub.s32 0, %v1170
    %v1172 = vrot.slane %v1152, %v1171
    %v1174 = vmul.f32 %v1167, %v1172
    %v1176 = vlaneseq
    %v1177 = vshrl.u32 %v1176, 7
    %v1178 = vsub.s32 0, %v1177
    %v1179 = vrot.slane %v1153, %v1178
    %v1181 = vadd.f32 %v1174, %v1179
    %v1182 = vmax.f32 %v1181, 0.0
    %v1183 = vld [vmem:[#allocation6] sm:$0xff]
    %v1184 = vld [vmem:[#allocation6 + $0x8] sm:$0xff]
    %v1185 = vld [vmem:[#allocation6 + $0x10] sm:$0xff]
    %v1186 = vld [vmem:[#allocation6 + $0x18] sm:$0xff]
    %v1187 = vld [vmem:[%s11] sm:$0x1]
    %v1189 = vlaneseq
    %v1190 = vshrl.u32 %v1189, 7
    %v1191 = vsub.s32 0, %v1190
    %v1192 = vrot.slane %v1187, %v1191
    %v1195 = vsel %vm245, %v1182, 0
    %1197 = vmatprep.subr.mxu0 0.0
    %1198 = vmatpush1.msra.mxu0 0.0
    %1199 = vmatprep.subr.mxu0 0.0
    %1200 = vmatpush1.msra.mxu0 0.0
    %1201 = vmatprep.subr.mxu0 0.0
    %1202 = vmatpush1.msra.mxu0 0.0
    %1203 = vmatprep.subr.mxu0 0.0
    %1204 = vmatpush1.msra.mxu0 0.0
    %1205 = vmatprep.subr.mxu0 0.0
    %1206 = vmatpush1.msra.mxu0 0.0
    %1207 = vmatprep.subr.mxu0 0.0
    %1208 = vmatpush1.msra.mxu0 0.0
    %1209 = vmatprep.subr.mxu0 0.0
    %1210 = vmatpush1.msra.mxu0 0.0
    %1211 = vmatprep.subr.mxu0 0.0
    %1212 = vmatpush1.msra.mxu0 0.0
    %1213 = vmatprep.subr.mxu0 0.0
    %1214 = vmatpush1.msra.mxu0 0.0
    %1215 = vmatprep.subr.mxu0 0.0
    %1216 = vmatpush1.msra.mxu0 0.0
    %1217 = vmatprep.subr.mxu0 0.0
    %1218 = vmatpush1.msra.mxu0 0.0
    %1219 = vmatprep.subr.mxu0 0.0
    %1220 = vmatpush1.msra.mxu0 0.0
    %1221 = vmatprep.subr.mxu0 0.0
    %1222 = vmatpush1.msra.mxu0 %v1186
    %1223 = vmatprep.subr.mxu0 0.0
    %1224 = vmatpush1.msra.mxu0 %v1185
    %1225 = vmatprep.subr.mxu0 0.0
    %1226 = vmatpush1.msra.mxu0 %v1184
    %1227 = vmatprep.subr.mxu0 0.0
    %1228 = vmatpush1.msra.mxu0 %v1183
    %1229 = vmatprep.subr.mxu0 0.0
    %1230 = vmatpush2.msra.mxu0 0.0
    %1231 = vmatprep.subr.mxu0 0.0
    %1232 = vmatpush2.msra.mxu0 0.0
    %1233 = vmatprep.subr.mxu0 0.0
    %1234 = vmatpush2.msra.mxu0 0.0
    %1235 = vmatprep.subr.mxu0 0.0
    %1236 = vmatpush2.msra.mxu0 0.0
    %1237 = vmatprep.subr.mxu0 0.0
    %1238 = vmatpush2.msra.mxu0 0.0
    %1239 = vmatprep.subr.mxu0 0.0
    %1240 = vmatpush2.msra.mxu0 0.0
    %1241 = vmatprep.subr.mxu0 0.0
    %1242 = vmatpush2.msra.mxu0 0.0
    %1243 = vmatprep.subr.mxu0 0.0
    %1244 = vmatpush2.msra.mxu0 0.0
    %1245 = vmatprep.subr.mxu0 0.0
    %1246 = vmatpush2.msra.mxu0 0.0
    %1247 = vmatprep.subr.mxu0 0.0
    %1248 = vmatpush2.msra.mxu0 0.0
    %1249 = vmatprep.subr.mxu0 0.0
    %1250 = vmatpush2.msra.mxu0 0.0
    %1251 = vmatprep.subr.mxu0 0.0
    %1252 = vmatpush2.msra.mxu0 0.0
    %1253 = vmatprep.subr.mxu0 0.0
    %1254 = vmatpush2.msra.mxu0 0.0
    %1255 = vmatprep.subr.mxu0 0.0
    %1256 = vmatpush2.msra.mxu0 0.0
    %1257 = vmatprep.subr.mxu0 0.0
    %1258 = vmatpush2.msra.mxu0 0.0
    %1259 = vmatprep.subr.mxu0 0.0
    %1260 = vmatpush2.msra.mxu0 0.0
    %1261 = vmatprep.mubr.f32.mxu0 0.0
    %1262 = vmatmul.mubr.f32.gmra.mxu0 %v1195
    %v1263 = vpop.f32.mrf.mxu0
    %v1264 = vadd.f32 %v1192, %v1263
    %v1265 = vpop.f32.mrf.mxu0
    %1266 = vdwg.mxu0
    %v1267 = vld [vmem:[%s12] sm:$0x1]
    %v1268 = vld [vmem:[%s13] sm:$0x1]
    %v1269 = vsel %vm245, %v1264, 0.0
    %1270 = vadd.xlane.f32.xlu0 %v1269
    %v1271 = vpop.xlane.xlu0 %1270
    %v1272 = vmul.f32 %v1271, %v1157
    %v1273 = vsub.f32 %v1264, %v1272
    %v1274 = vmul.f32 %v1273, %v1273
    %v1275 = vsel %vm245, %v1274, 0.0
    %1276 = vadd.xlane.f32.xlu0 %v1275
    %v1277 = vpop.xlane.xlu0 %1276
    %v1278 = vmul.f32 %v1277, %v1157
    %v1279 = vadd.f32 %v1278, 1e-05
    %v1280 = vrsqrt.pop %v1279
    %v1281 = vmul.f32 %v1273, %v1280
    %v1283 = vlaneseq
    %v1284 = vshrl.u32 %v1283, 7
    %v1285 = vsub.s32 0, %v1284
    %v1286 = vrot.slane %v1267, %v1285
    %v1288 = vmul.f32 %v1281, %v1286
    %v1290 = vlaneseq
    %v1291 = vshrl.u32 %v1290, 7
    %v1292 = vsub.s32 0, %v1291
    %v1293 = vrot.slane %v1268, %v1292
    %v1295 = vadd.f32 %v1288, %v1293
    %v1296 = vmax.f32 %v1295, 0.0
    %v1297 = vld [vmem:[%s14] sm:$0xff]
    %v1298 = vld [vmem:[%s14 + $0x8] sm:$0xff]
    %v1299 = vld [vmem:[%s14 + $0x10] sm:$0xff]
    %v1300 = vld [vmem:[%s14 + $0x18] sm:$0xff]
    %v1301 = vld [vmem:[%s15] sm:$0x1]
    %v1303 = vlaneseq
    %v1304 = vshrl.u32 %v1303, 7
    %v1305 = vsub.s32 0, %v1304
    %v1306 = vrot.slane %v1301, %v1305
    %v1309 = vsel %vm245, %v1296, 0
    %1311 = vmatprep.subr.mxu0 0.0
    %1312 = vmatpush1.msra.mxu0 0.0
    %1313 = vmatprep.subr.mxu0 0.0
    %1314 = vmatpush1.msra.mxu0 0.0
    %1315 = vmatprep.subr.mxu0 0.0
    %1316 = vmatpush1.msra.mxu0 0.0
    %1317 = vmatprep.subr.mxu0 0.0
    %1318 = vmatpush1.msra.mxu0 0.0
    %1319 = vmatprep.subr.mxu0 0.0
    %1320 = vmatpush1.msra.mxu0 0.0
    %1321 = vmatprep.subr.mxu0 0.0
    %1322 = vmatpush1.msra.mxu0 0.0
    %1323 = vmatprep.subr.mxu0 0.0
    %1324 = vmatpush1.msra.mxu0 0.0
    %1325 = vmatprep.subr.mxu0 0.0
    %1326 = vmatpush1.msra.mxu0 0.0
    %1327 = vmatprep.subr.mxu0 0.0
    %1328 = vmatpush1.msra.mxu0 0.0
    %1329 = vmatprep.subr.mxu0 0.0
    %1330 = vmatpush1.msra.mxu0 0.0
    %1331 = vmatprep.subr.mxu0 0.0
    %1332 = vmatpush1.msra.mxu0 0.0
    %1333 = vmatprep.subr.mxu0 0.0
    %1334 = vmatpush1.msra.mxu0 0.0
    %1335 = vmatprep.subr.mxu0 0.0
    %1336 = vmatpush1.msra.mxu0 %v1300
    %1337 = vmatprep.subr.mxu0 0.0
    %1338 = vmatpush1.msra.mxu0 %v1299
    %1339 = vmatprep.subr.mxu0 0.0
    %1340 = vmatpush1.msra.mxu0 %v1298
    %1341 = vmatprep.subr.mxu0 0.0
    %1342 = vmatpush1.msra.mxu0 %v1297
    %1343 = vmatprep.subr.mxu0 0.0
    %1344 = vmatpush2.msra.mxu0 0.0
    %1345 = vmatprep.subr.mxu0 0.0
    %1346 = vmatpush2.msra.mxu0 0.0
    %1347 = vmatprep.subr.mxu0 0.0
    %1348 = vmatpush2.msra.mxu0 0.0
    %1349 = vmatprep.subr.mxu0 0.0
    %1350 = vmatpush2.msra.mxu0 0.0
    %1351 = vmatprep.subr.mxu0 0.0
    %1352 = vmatpush2.msra.mxu0 0.0
    %1353 = vmatprep.subr.mxu0 0.0
    %1354 = vmatpush2.msra.mxu0 0.0
    %1355 = vmatprep.subr.mxu0 0.0
    %1356 = vmatpush2.msra.mxu0 0.0
    %1357 = vmatprep.subr.mxu0 0.0
    %1358 = vmatpush2.msra.mxu0 0.0
    %1359 = vmatprep.subr.mxu0 0.0
    %1360 = vmatpush2.msra.mxu0 0.0
    %1361 = vmatprep.subr.mxu0 0.0
    %1362 = vmatpush2.msra.mxu0 0.0
    %1363 = vmatprep.subr.mxu0 0.0
    %1364 = vmatpush2.msra.mxu0 0.0
    %1365 = vmatprep.subr.mxu0 0.0
    %1366 = vmatpush2.msra.mxu0 0.0
    %1367 = vmatprep.subr.mxu0 0.0
    %1368 = vmatpush2.msra.mxu0 0.0
    %1369 = vmatprep.subr.mxu0 0.0
    %1370 = vmatpush2.msra.mxu0 0.0
    %1371 = vmatprep.subr.mxu0 0.0
    %1372 = vmatpush2.msra.mxu0 0.0
    %1373 = vmatprep.subr.mxu0 0.0
    %1374 = vmatpush2.msra.mxu0 0.0
    %1375 = vmatprep.mubr.f32.mxu0 0.0
    %1376 = vmatmul.mubr.f32.gmra.mxu0 %v1309
    %v1377 = vpop.f32.mrf.mxu0
    %v1378 = vadd.f32 %v1306, %v1377
    %v1379 = vpop.f32.mrf.mxu0
    %1380 = vdwg.mxu0
    %v1381 = vtanh.pop %v1378
    %vm1382 = vcmask 15360
    %1383 = vst.msk [vmem:[%s16] sm:$0xff] %vm1382, %v1381
    // Predicated region
    $region78: #{tpu_custom_call.1} parent=1 // pred_check
      _
    $region79: #{tpu_custom_call.1} parent=1 // pred_check_branch
      %1385 = sbr.rel (0) target = $region81
    $region80: #{tpu_custom_call.1} parent=1 // pred_region
      _
    $region81: #{tpu_custom_call.1} parent=1 // pred_fallthru
      _
    // Predicated region
    $region82: #{tpu_custom_call.1} parent=1 // pred_check
      _
    $region83: #{tpu_custom_call.1} parent=1 // pred_check_branch
      %1387 = sbr.rel (0) target = $region85
    $region84: #{tpu_custom_call.1} parent=1 // pred_region
      _
    $region85: #{tpu_custom_call.1} parent=1 // pred_fallthru
      _
    %1388 = vsyncpa [#allocation3], 1
    %1389 = vsyncpa [#allocation5], 1

</llo_original>
